<compile_context>
chip_gen: v5e
topology: v5e:2x2
jax: 0.10.0
libtpu: 0.0.40
codegen_flags: <defaults>
</compile_context>

<pallas_src>
import functools

import jax
import jax.numpy as jnp
from jax.experimental import pallas as pl
from jax.experimental.pallas import tpu as pltpu

HIDDEN = 100        # fixed by the module definition
HIDDEN_PAD = 128    # zero-padded hidden width used inside the kernel


def _round_up(x, m):
    return -(-x // m) * m


def _transition_kernel(states_ref, actions_ref,
                       w1s_ref, w1a_ref, b1_ref,
                       w2_ref, b2_ref,
                       wh_ref, bh_ref,
                       out_ref):
    states = states_ref[...]                 # (TB, S) bf16
    acts = actions_ref[...]                  # (TB, 1) int32
    A = w1a_ref.shape[0]

    # ---- Layer 1: Linear(S + A, 100) + ReLU ------------------------------------------
    # cat([states, onehot], 1) @ W1 == states @ W1[:S]  +  W1[S + action]  (row select).
    h1 = jnp.dot(states, w1s_ref[...], preferred_element_type=jnp.float32)   # MXU, (TB, HP) f32
    w1a = w1a_ref[...].astype(jnp.float32)                                   # (A, HP), A is tiny
    a_rows = jnp.zeros_like(h1)
    for a in range(A):  # static, unrolled; pure VPU select — replaces the one-hot matmul
        sel = (acts == a).astype(jnp.float32)                 # (TB, 1)
        a_rows = a_rows + sel * w1a[a:a + 1, :]               # (TB,1)*(1,HP) -> (TB,HP)
    # Note: out-of-range action indices contribute zero (torch one_hot would raise instead).
    h1 = jnp.maximum(h1 + a_rows + b1_ref[...], 0.0)

    # ---- Layer 2: Linear(100, 100) + ReLU --------------------------------------------
    h2 = jnp.dot(h1.astype(jnp.bfloat16), w2_ref[...],
                 preferred_element_type=jnp.float32) + b2_ref[...]
    h2 = jnp.maximum(h2, 0.0)

    # ---- Fused Gaussian head: one matmul producing [mean | log_var] (lane-padded) -----
    out = jnp.dot(h2.astype(jnp.bfloat16), wh_ref[...],
                  preferred_element_type=jnp.float32) + bh_ref[...]
    out_ref[...] = out.astype(out_ref.dtype)


def init_params(key, n_states, n_actions):
    """Raw f32 parameters, PyTorch-equivalent but stored transposed (in, out)."""
    ks = jax.random.split(key, 8)
    s = 0.1
    return {
        "w1": jax.random.normal(ks[0], (n_states + n_actions, HIDDEN), jnp.float32) * s,
        "b1": jax.random.normal(ks[1], (1, HIDDEN), jnp.float32) * s,
        "w2": jax.random.normal(ks[2], (HIDDEN, HIDDEN), jnp.float32) * s,
        "b2": jax.random.normal(ks[3], (1, HIDDEN), jnp.float32) * s,
        "wm": jax.random.normal(ks[4], (HIDDEN, n_states), jnp.float32) * s,
        "bm": jax.random.normal(ks[5], (1, n_states), jnp.float32) * s,
        "wv": jax.random.normal(ks[6], (HIDDEN, n_states), jnp.float32) * s,
        "bv": jax.random.normal(ks[7], (1, n_states), jnp.float32) * s,
    }


def pack_params(raw, n_states, n_actions):
    """Pad HIDDEN->128, fuse head weights, cast matmul operands to bf16 (biases stay f32)."""
    S, A, H, HP = n_states, n_actions, HIDDEN, HIDDEN_PAD
    out_dim = 2 * S
    out_pad = _round_up(out_dim, 128)

    w1p = jnp.zeros((S + A, HP), jnp.float32).at[:, :H].set(raw["w1"])
    w2p = jnp.zeros((HP, HP), jnp.float32).at[:H, :H].set(raw["w2"])
    wh = jnp.concatenate([raw["wm"], raw["wv"]], axis=1)          # (H, 2S)
    whp = jnp.zeros((HP, out_pad), jnp.float32).at[:H, :out_dim].set(wh)
    bh = jnp.concatenate([raw["bm"], raw["bv"]], axis=1)          # (1, 2S)
    bhp = jnp.zeros((1, out_pad), jnp.float32).at[:, :out_dim].set(bh)
    b1p = jnp.zeros((1, HP), jnp.float32).at[:, :H].set(raw["b1"])
    b2p = jnp.zeros((1, HP), jnp.float32).at[:, :H].set(raw["b2"])

    return {
        "w1s": w1p[:S].astype(jnp.bfloat16),     # (S, 128)
        "w1a": w1p[S:].astype(jnp.bfloat16),     # (A, 128)
        "b1": b1p,                               # (1, 128) f32
        "w2": w2p.astype(jnp.bfloat16),          # (128, 128)
        "b2": b2p,                               # (1, 128) f32
        "wh": whp.astype(jnp.bfloat16),          # (128, out_pad)
        "bh": bhp,                               # (1, out_pad) f32
    }


def transition_network(states, actions, packed, *, block_b=256):
    """Forward pass. states: (B, S) f32, actions: (B,) int -> (mean, log_var), each (B, S) f32."""
    B, S = states.shape
    A = packed["w1a"].shape[0]
    HP = packed["w2"].shape[0]
    OUTP = packed["wh"].shape[1]

    # Batch tile: multiple of 8 (sublane), default 256 (fills the 2x256 MXU on v6e/v7x).
    TB = min(block_b, _round_up(B, 8))
    B_pad = _round_up(B, TB)
    grid = (B_pad // TB,)

    states_p = jnp.zeros((B_pad, S), jnp.bfloat16).at[:B].set(states.astype(jnp.bfloat16))
    actions_p = jnp.zeros((B_pad, 1), jnp.int32).at[:B, 0].set(actions.astype(jnp.int32))

    out = pl.pallas_call(
        _transition_kernel,
        out_shape=jax.ShapeDtypeStruct((B_pad, OUTP), jnp.float32),
        grid=grid,
        in_specs=[
            pl.BlockSpec((TB, S), lambda i: (i, 0)),      # states: blocked over batch
            pl.BlockSpec((TB, 1), lambda i: (i, 0)),      # actions: blocked over batch
            pl.BlockSpec((S, HP), lambda i: (0, 0)),      # w1s: resident
            pl.BlockSpec((A, HP), lambda i: (0, 0)),      # w1a: resident
            pl.BlockSpec((1, HP), lambda i: (0, 0)),      # b1
            pl.BlockSpec((HP, HP), lambda i: (0, 0)),     # w2
            pl.BlockSpec((1, HP), lambda i: (0, 0)),      # b2
            pl.BlockSpec((HP, OUTP), lambda i: (0, 0)),   # wh (fused head)
            pl.BlockSpec((1, OUTP), lambda i: (0, 0)),    # bh
        ],
        out_specs=pl.BlockSpec((TB, OUTP), lambda i: (i, 0)),
        compiler_params=pltpu.CompilerParams(
            dimension_semantics=("parallel",),            # megacore-shardable batch axis
        ),
    )(states_p, actions_p,
      packed["w1s"], packed["w1a"], packed["b1"],
      packed["w2"], packed["b2"],
      packed["wh"], packed["bh"])

    mean = out[:B, :S]
    log_var = out[:B, S:2 * S]
    return mean, log_var


def reference_forward(states, actions, raw, n_actions):
    """Pure-JAX reference mirroring the PyTorch forward with the same bf16/f32 precision."""
    bf = lambda t: t.astype(jnp.bfloat16)
    onehot = jax.nn.one_hot(actions.astype(jnp.int32), n_actions, dtype=jnp.float32)
    x = jnp.concatenate([states, onehot], axis=1)
    h1 = jnp.maximum(
        jnp.dot(bf(x), bf(raw["w1"]), preferred_element_type=jnp.float32) + raw["b1"], 0.0)
    h2 = jnp.maximum(
        jnp.dot(bf(h1), bf(raw["w2"]), preferred_element_type=jnp.float32) + raw["b2"], 0.0)
    wh = jnp.concatenate([raw["wm"], raw["wv"]], axis=1)
    bh = jnp.concatenate([raw["bm"], raw["bv"]], axis=1)
    out = jnp.dot(bf(h2), bf(wh), preferred_element_type=jnp.float32) + bh
    S = states.shape[1]
    return out[:, :S], out[:, S:]


if __name__ == "__main__":
    n_states, n_actions, batch = 16, 4, 512   # batch=512 -> grid=(2,) with TB=256

    key = jax.random.PRNGKey(0)
    k_params, k_states, k_actions = jax.random.split(key, 3)

    raw_params = init_params(k_params, n_states, n_actions)
    packed_params = pack_params(raw_params, n_states, n_actions)

    states = jax.random.normal(k_states, (batch, n_states), jnp.float32)
    actions = jax.random.randint(k_actions, (batch,), 0, n_actions, jnp.int32)

    fwd = jax.jit(functools.partial(transition_network, packed=packed_params))
    mean, log_var = fwd(states, actions)
    jax.block_until_ready((mean, log_var))

    ref_mean, ref_logv = reference_forward(states, actions, raw_params, n_actions)

    assert mean.shape == (batch, n_states) and log_var.shape == (batch, n_states)
    assert jnp.allclose(mean, ref_mean, atol=1e-3, rtol=1e-3)
    assert jnp.allclose(log_var, ref_logv, atol=1e-3, rtol=1e-3)

    print("KERNEL_OK")
</pallas_src>

<mosaic_0001>
module attributes {stable_mosaic.version = 11 : i64} {
  func.func @_transition_kernel(%arg0: i32, %arg1: memref<256x16xbf16, #tpu.memory_space<vmem>>, %arg2: memref<256x1xi32, #tpu.memory_space<vmem>>, %arg3: memref<16x128xbf16, #tpu.memory_space<vmem>>, %arg4: memref<4x128xbf16, #tpu.memory_space<vmem>>, %arg5: memref<1x128xf32, #tpu.memory_space<vmem>>, %arg6: memref<128x128xbf16, #tpu.memory_space<vmem>>, %arg7: memref<1x128xf32, #tpu.memory_space<vmem>>, %arg8: memref<128x128xbf16, #tpu.memory_space<vmem>>, %arg9: memref<1x128xf32, #tpu.memory_space<vmem>>, %arg10: memref<256x128xf32, #tpu.memory_space<vmem>>) attributes {dimension_semantics = [#tpu.dimension_semantics<parallel>], iteration_bounds = array<i64: 2>, scalar_prefetch = 0 : i64, scratch_operands = 0 : i64, tpu.core_type = #tpu.core_type<tc>, window_params = [{transform_indices = @transform_0, window_bounds = array<i64: 256, 16>}, {transform_indices = @transform_1, window_bounds = array<i64: 256, 1>}, {pipeline_mode = #tpu.pipeline_mode<synchronous>, transform_indices = @transform_2, window_bounds = array<i64: 16, 128>}, {pipeline_mode = #tpu.pipeline_mode<synchronous>, transform_indices = @transform_3, window_bounds = array<i64: 4, 128>}, {pipeline_mode = #tpu.pipeline_mode<synchronous>, transform_indices = @transform_4, window_bounds = array<i64: 1, 128>}, {pipeline_mode = #tpu.pipeline_mode<synchronous>, transform_indices = @transform_5, window_bounds = array<i64: 128, 128>}, {pipeline_mode = #tpu.pipeline_mode<synchronous>, transform_indices = @transform_6, window_bounds = array<i64: 1, 128>}, {pipeline_mode = #tpu.pipeline_mode<synchronous>, transform_indices = @transform_7, window_bounds = array<i64: 128, 128>}, {pipeline_mode = #tpu.pipeline_mode<synchronous>, transform_indices = @transform_8, window_bounds = array<i64: 1, 128>}, {transform_indices = @transform_9, window_bounds = array<i64: 256, 128>}]} {
    %c0 = arith.constant 0 : index
    %c0_0 = arith.constant 0 : index
    %0 = vector.load %arg1[%c0, %c0_0] : memref<256x16xbf16, #tpu.memory_space<vmem>>, vector<256x16xbf16>
    %c0_1 = arith.constant 0 : index
    %c0_2 = arith.constant 0 : index
    %1 = vector.load %arg2[%c0_1, %c0_2] : memref<256x1xi32, #tpu.memory_space<vmem>>, vector<256x1xi32>
    %c0_3 = arith.constant 0 : index
    %c0_4 = arith.constant 0 : index
    %2 = vector.load %arg3[%c0_3, %c0_4] : memref<16x128xbf16, #tpu.memory_space<vmem>>, vector<16x128xbf16>
    %cst = arith.constant dense<0.000000e+00> : vector<256x128xf32>
    %3 = tpu.matmul %0, %2, %cst {dimension_numbers = #tpu.dot_dimension_numbers<[1], [0], [0], [1], [0, 0, 1, 1], [], []>} : vector<256x16xbf16>, vector<16x128xbf16>, vector<256x128xf32> -> vector<256x128xf32>
    %c0_5 = arith.constant 0 : index
    %c0_6 = arith.constant 0 : index
    %4 = vector.load %arg4[%c0_5, %c0_6] : memref<4x128xbf16, #tpu.memory_space<vmem>>, vector<4x128xbf16>
    %5 = arith.extf %4 : vector<4x128xbf16> to vector<4x128xf32>
    %cst_7 = arith.constant 0.000000e+00 : f32
    %6 = vector.broadcast %cst_7 : f32 to vector<256x128xf32>
    %c0_i32 = arith.constant 0 : i32
    %7 = vector.broadcast %c0_i32 : i32 to vector<256x1xi32>
    %8 = arith.cmpi eq, %1, %7 : vector<256x1xi32>
    %9 = arith.extui %8 : vector<256x1xi1> to vector<256x1xi32>
    %10 = arith.sitofp %9 : vector<256x1xi32> to vector<256x1xf32>
    %11 = vector.extract_strided_slice %5 {offsets = [0, 0], sizes = [1, 128], strides = [1, 1]} : vector<4x128xf32> to vector<1x128xf32>
    %12 = vector.broadcast %10 : vector<256x1xf32> to vector<256x128xf32>
    %13 = vector.broadcast %11 : vector<1x128xf32> to vector<256x128xf32>
    %14 = arith.mulf %12, %13 : vector<256x128xf32>
    %15 = arith.addf %6, %14 : vector<256x128xf32>
    %c1_i32 = arith.constant 1 : i32
    %16 = vector.broadcast %c1_i32 : i32 to vector<256x1xi32>
    %17 = arith.cmpi eq, %1, %16 : vector<256x1xi32>
    %18 = arith.extui %17 : vector<256x1xi1> to vector<256x1xi32>
    %19 = arith.sitofp %18 : vector<256x1xi32> to vector<256x1xf32>
    %20 = vector.extract_strided_slice %5 {offsets = [1, 0], sizes = [1, 128], strides = [1, 1]} : vector<4x128xf32> to vector<1x128xf32>
    %21 = vector.broadcast %19 : vector<256x1xf32> to vector<256x128xf32>
    %22 = vector.broadcast %20 : vector<1x128xf32> to vector<256x128xf32>
    %23 = arith.mulf %21, %22 : vector<256x128xf32>
    %24 = arith.addf %15, %23 : vector<256x128xf32>
    %c2_i32 = arith.constant 2 : i32
    %25 = vector.broadcast %c2_i32 : i32 to vector<256x1xi32>
    %26 = arith.cmpi eq, %1, %25 : vector<256x1xi32>
    %27 = arith.extui %26 : vector<256x1xi1> to vector<256x1xi32>
    %28 = arith.sitofp %27 : vector<256x1xi32> to vector<256x1xf32>
    %29 = vector.extract_strided_slice %5 {offsets = [2, 0], sizes = [1, 128], strides = [1, 1]} : vector<4x128xf32> to vector<1x128xf32>
    %30 = vector.broadcast %28 : vector<256x1xf32> to vector<256x128xf32>
    %31 = vector.broadcast %29 : vector<1x128xf32> to vector<256x128xf32>
    %32 = arith.mulf %30, %31 : vector<256x128xf32>
    %33 = arith.addf %24, %32 : vector<256x128xf32>
    %c3_i32 = arith.constant 3 : i32
    %34 = vector.broadcast %c3_i32 : i32 to vector<256x1xi32>
    %35 = arith.cmpi eq, %1, %34 : vector<256x1xi32>
    %36 = arith.extui %35 : vector<256x1xi1> to vector<256x1xi32>
    %37 = arith.sitofp %36 : vector<256x1xi32> to vector<256x1xf32>
    %38 = vector.extract_strided_slice %5 {offsets = [3, 0], sizes = [1, 128], strides = [1, 1]} : vector<4x128xf32> to vector<1x128xf32>
    %39 = vector.broadcast %37 : vector<256x1xf32> to vector<256x128xf32>
    %40 = vector.broadcast %38 : vector<1x128xf32> to vector<256x128xf32>
    %41 = arith.mulf %39, %40 : vector<256x128xf32>
    %42 = arith.addf %33, %41 : vector<256x128xf32>
    %43 = arith.addf %3, %42 : vector<256x128xf32>
    %c0_8 = arith.constant 0 : index
    %c0_9 = arith.constant 0 : index
    %44 = vector.load %arg5[%c0_8, %c0_9] : memref<1x128xf32, #tpu.memory_space<vmem>>, vector<1x128xf32>
    %45 = vector.broadcast %44 : vector<1x128xf32> to vector<256x128xf32>
    %46 = arith.addf %43, %45 : vector<256x128xf32>
    %cst_10 = arith.constant 0.000000e+00 : f32
    %47 = vector.broadcast %cst_10 : f32 to vector<256x128xf32>
    %48 = arith.maximumf %46, %47 : vector<256x128xf32>
    %49 = arith.truncf %48 : vector<256x128xf32> to vector<256x128xbf16>
    %c0_11 = arith.constant 0 : index
    %c0_12 = arith.constant 0 : index
    %50 = vector.load %arg6[%c0_11, %c0_12] : memref<128x128xbf16, #tpu.memory_space<vmem>>, vector<128x128xbf16>
    %cst_13 = arith.constant dense<0.000000e+00> : vector<256x128xf32>
    %51 = tpu.matmul %49, %50, %cst_13 {dimension_numbers = #tpu.dot_dimension_numbers<[1], [0], [0], [1], [0, 0, 1, 1], [], []>} : vector<256x128xbf16>, vector<128x128xbf16>, vector<256x128xf32> -> vector<256x128xf32>
    %c0_14 = arith.constant 0 : index
    %c0_15 = arith.constant 0 : index
    %52 = vector.load %arg7[%c0_14, %c0_15] : memref<1x128xf32, #tpu.memory_space<vmem>>, vector<1x128xf32>
    %53 = vector.broadcast %52 : vector<1x128xf32> to vector<256x128xf32>
    %54 = arith.addf %51, %53 : vector<256x128xf32>
    %cst_16 = arith.constant 0.000000e+00 : f32
    %55 = vector.broadcast %cst_16 : f32 to vector<256x128xf32>
    %56 = arith.maximumf %54, %55 : vector<256x128xf32>
    %57 = arith.truncf %56 : vector<256x128xf32> to vector<256x128xbf16>
    %c0_17 = arith.constant 0 : index
    %c0_18 = arith.constant 0 : index
    %58 = vector.load %arg8[%c0_17, %c0_18] : memref<128x128xbf16, #tpu.memory_space<vmem>>, vector<128x128xbf16>
    %cst_19 = arith.constant dense<0.000000e+00> : vector<256x128xf32>
    %59 = tpu.matmul %57, %58, %cst_19 {dimension_numbers = #tpu.dot_dimension_numbers<[1], [0], [0], [1], [0, 0, 1, 1], [], []>} : vector<256x128xbf16>, vector<128x128xbf16>, vector<256x128xf32> -> vector<256x128xf32>
    %c0_20 = arith.constant 0 : index
    %c0_21 = arith.constant 0 : index
    %60 = vector.load %arg9[%c0_20, %c0_21] : memref<1x128xf32, #tpu.memory_space<vmem>>, vector<1x128xf32>
    %61 = vector.broadcast %60 : vector<1x128xf32> to vector<256x128xf32>
    %62 = arith.addf %59, %61 : vector<256x128xf32>
    %c0_22 = arith.constant 0 : index
    %c0_23 = arith.constant 0 : index
    %63 = vector.load %arg10[%c0_22, %c0_23] : memref<256x128xf32, #tpu.memory_space<vmem>>, vector<256x128xf32>
    tpu.vector_store %arg10[%c0_22, %c0_23], %62 {strides = array<i32>} : memref<256x128xf32, #tpu.memory_space<vmem>>, vector<256x128xf32>,
    return
  }
  func.func @transform_0(%arg0: i32) -> (i32, i32) {
    %c0_i32 = arith.constant 0 : i32
    %c0_i32_0 = arith.constant 0 : i32
    return %arg0, %c0_i32 : i32, i32
  }
  func.func @transform_1(%arg0: i32) -> (i32, i32) {
    %c0_i32 = arith.constant 0 : i32
    %c0_i32_0 = arith.constant 0 : i32
    return %arg0, %c0_i32 : i32, i32
  }
  func.func @transform_2(%arg0: i32) -> (i32, i32) {
    %c0_i32 = arith.constant 0 : i32
    %c0_i32_0 = arith.constant 0 : i32
    %c0_i32_1 = arith.constant 0 : i32
    return %c0_i32, %c0_i32_0 : i32, i32
  }
  func.func @transform_3(%arg0: i32) -> (i32, i32) {
    %c0_i32 = arith.constant 0 : i32
    %c0_i32_0 = arith.constant 0 : i32
    %c0_i32_1 = arith.constant 0 : i32
    return %c0_i32, %c0_i32_0 : i32, i32
  }
  func.func @transform_4(%arg0: i32) -> (i32, i32) {
    %c0_i32 = arith.constant 0 : i32
    %c0_i32_0 = arith.constant 0 : i32
    %c0_i32_1 = arith.constant 0 : i32
    return %c0_i32, %c0_i32_0 : i32, i32
  }
  func.func @transform_5(%arg0: i32) -> (i32, i32) {
    %c0_i32 = arith.constant 0 : i32
    %c0_i32_0 = arith.constant 0 : i32
    %c0_i32_1 = arith.constant 0 : i32
    return %c0_i32, %c0_i32_0 : i32, i32
  }
  func.func @transform_6(%arg0: i32) -> (i32, i32) {
    %c0_i32 = arith.constant 0 : i32
    %c0_i32_0 = arith.constant 0 : i32
    %c0_i32_1 = arith.constant 0 : i32
    return %c0_i32, %c0_i32_0 : i32, i32
  }
  func.func @transform_7(%arg0: i32) -> (i32, i32) {
    %c0_i32 = arith.constant 0 : i32
    %c0_i32_0 = arith.constant 0 : i32
    %c0_i32_1 = arith.constant 0 : i32
    return %c0_i32, %c0_i32_0 : i32, i32
  }
  func.func @transform_8(%arg0: i32) -> (i32, i32) {
    %c0_i32 = arith.constant 0 : i32
    %c0_i32_0 = arith.constant 0 : i32
    %c0_i32_1 = arith.constant 0 : i32
    return %c0_i32, %c0_i32_0 : i32, i32
  }
  func.func @transform_9(%arg0: i32) -> (i32, i32) {
    %c0_i32 = arith.constant 0 : i32
    %c0_i32_0 = arith.constant 0 : i32
    return %arg0, %c0_i32 : i32, i32
  }
}

</mosaic_0001>

<llo_original>
// kernel: transition_network.1
$region0: #{transition_network.1}
  #allocation0 [shape = 'u32[]', space=smem, size = 0x4, offset = 0x4, fixed_abs, tag = 'smem constant byte address 0x4 - core index']
  #allocation1 [shape = 'u32[72,128]{1,0:T(1,128)}', space=vmem, size = 0x9000, scoped, tag = 'internal scratch']
  %s0 = inlined_call_operand.vmem [shape: bf16[512,16], index: 0, kind: input, shape index: {}]
  %s1 = inlined_call_operand.vmem [shape: s32[512,1], index: 1, kind: input, shape index: {}]
  %s2 = inlined_call_operand.vmem [shape: bf16[16,128], index: 2, kind: input, shape index: {}]
  %s3 = inlined_call_operand.vmem [shape: bf16[4,128], index: 3, kind: input, shape index: {}]
  %s4 = inlined_call_operand.vmem [shape: f32[1,128], index: 4, kind: input, shape index: {}]
  %s5 = inlined_call_operand.vmem [shape: bf16[128,128], index: 5, kind: input, shape index: {}]
  %s6 = inlined_call_operand.vmem [shape: f32[1,128], index: 6, kind: input, shape index: {}]
  %s7 = inlined_call_operand.vmem [shape: bf16[128,128], index: 7, kind: input, shape index: {}]
  %s8 = inlined_call_operand.vmem [shape: f32[1,128], index: 8, kind: input, shape index: {}]
  %s9 = inlined_call_operand.vmem [shape: f32[512,128], index: 9, kind: output, shape index: {}]
  %s10 = sld [smem:[#allocation0]]
  $region69: #{transition_network.1} parent=0
    _
  %s12 = ssub.s32 1, %s10
  %s13 = scalar_select 0, %s12, %s10
  loop: start=0, step=1, limit=4
  $region2: #{transition_network.1} parent=0 // loop_pre_header
    _
  $region3: #{transition_network.1} parent=0 // loop_header
    %s15 = sphi 0, %s19
    %p16 = scmp.ge.s32.totalorder %s15, 4
    %s25 = sphi 0, %s27
    %s28 = sphi 0, %s25
    %s29 = sphi 0, %s28
    %s45 = sphi 0, %s29
    %s51 = sphi 0, %s53
    %s54 = sphi 0, %s51
    %s55 = sphi 0, %s54
    %s71 = sphi 0, %s55
    %s75 = sphi 0, %s75
    %s77 = sphi 0, %s75
    %s78 = sphi 0, %s77
    %s92 = sphi 0, %s78
    %s96 = sphi 0, %s96
    %s98 = sphi 0, %s96
    %s99 = sphi 0, %s98
    %s113 = sphi 0, %s99
    %s117 = sphi 0, %s117
    %s119 = sphi 0, %s117
    %s120 = sphi 0, %s119
    %s134 = sphi 0, %s120
    %s138 = sphi 0, %s138
    %s140 = sphi 0, %s138
    %s141 = sphi 0, %s140
    %s155 = sphi 0, %s141
    %s159 = sphi 0, %s159
    %s161 = sphi 0, %s159
    %s162 = sphi 0, %s161
    %s176 = sphi 0, %s162
    %s180 = sphi 0, %s180
    %s182 = sphi 0, %s180
    %s183 = sphi 0, %s182
    %s197 = sphi 0, %s183
    %s201 = sphi 0, %s201
    %s203 = sphi 0, %s201
    %s204 = sphi 0, %s203
    %s218 = sphi 0, %s204
    %s224 = sphi 0, %s226
    %s227 = sphi 0, %s224
    %s228 = sphi 0, %s227
    %s244 = sphi 0, %s228
  $region4: #{transition_network.1} parent=0 // loop_header_branch
    %18 = sbr.rel (%p16) target = $region8
  $region5: #{transition_network.1} parent=0 // loop_body
    %s20 = ssub.s32 %s15, 1
    %s21 = ssub.s32 %s15, 2
    %s22 = sadd.s32 %s15, 1
    %s23 = ssub.s32 %s15, %s22
    %p24 = scmp.eq.s32.totalorder %s23, 0
    %s26 = sadd.s32 %s25, 1
    %s27 = scalar_select %p24, %s25, %s26
    %p30 = pneg %p24
    %p31 = scmp.eq.s32.totalorder %s15, 1
    %p32 = por %p30, %p31
    %p33 = scmp.ne.s32.totalorder %s25, %s28
    %p34 = scmp.eq.s32.totalorder %s15, 0
    %p35 = por %p33, %p34
    %p36 = scmp.ne.s32.totalorder %s25, %s28
    %p37 = scmp.eq.s32.totalorder %s20, 1
    %p38 = por %p36, %p37
    %p39 = scmp.ne.s32.totalorder %s28, %s29
    %p40 = scmp.eq.s32.totalorder %s20, 0
    %p41 = por %p39, %p40
    %p42 = scmp.ne.s32.totalorder %s28, %s29
    %p43 = scmp.eq.s32.totalorder %s21, 1
    %p44 = por %p42, %p43
    %p46 = scmp.ne.s32.totalorder %s29, %s45
    %p47 = scmp.eq.s32.totalorder %s21, 0
    %p48 = por %p46, %p47
    %s49 = ssub.s32 %s15, %s22
    %p50 = scmp.eq.s32.totalorder %s49, 0
    %s52 = sadd.s32 %s51, 1
    %s53 = scalar_select %p50, %s51, %s52
    %p56 = pneg %p50
    %p57 = scmp.eq.s32.totalorder %s15, 1
    %p58 = por %p56, %p57
    %p59 = scmp.ne.s32.totalorder %s51, %s54
    %p60 = scmp.eq.s32.totalorder %s15, 0
    %p61 = por %p59, %p60
    %p62 = scmp.ne.s32.totalorder %s51, %s54
    %p63 = scmp.eq.s32.totalorder %s20, 1
    %p64 = por %p62, %p63
    %p65 = scmp.ne.s32.totalorder %s54, %s55
    %p66 = scmp.eq.s32.totalorder %s20, 0
    %p67 = por %p65, %p66
    %p68 = scmp.ne.s32.totalorder %s54, %s55
    %p69 = scmp.eq.s32.totalorder %s21, 1
    %p70 = por %p68, %p69
    %p72 = scmp.ne.s32.totalorder %s55, %s71
    %p73 = scmp.eq.s32.totalorder %s21, 0
    %p74 = por %p72, %p73
    %s76 = sadd.s32 %s75, 1
    %p79 = scmp.eq.s32.totalorder %s15, 1
    %p80 = scmp.ne.s32.totalorder %s75, %s77
    %p81 = scmp.eq.s32.totalorder %s15, 0
    %p82 = por %p80, %p81
    %p83 = scmp.ne.s32.totalorder %s75, %s77
    %p84 = scmp.eq.s32.totalorder %s20, 1
    %p85 = por %p83, %p84
    %p86 = scmp.ne.s32.totalorder %s77, %s78
    %p87 = scmp.eq.s32.totalorder %s20, 0
    %p88 = por %p86, %p87
    %p89 = scmp.ne.s32.totalorder %s77, %s78
    %p90 = scmp.eq.s32.totalorder %s21, 1
    %p91 = por %p89, %p90
    %p93 = scmp.ne.s32.totalorder %s78, %s92
    %p94 = scmp.eq.s32.totalorder %s21, 0
    %p95 = por %p93, %p94
    %s97 = sadd.s32 %s96, 1
    %p100 = scmp.eq.s32.totalorder %s15, 1
    %p101 = scmp.ne.s32.totalorder %s96, %s98
    %p102 = scmp.eq.s32.totalorder %s15, 0
    %p103 = por %p101, %p102
    %p104 = scmp.ne.s32.totalorder %s96, %s98
    %p105 = scmp.eq.s32.totalorder %s20, 1
    %p106 = por %p104, %p105
    %p107 = scmp.ne.s32.totalorder %s98, %s99
    %p108 = scmp.eq.s32.totalorder %s20, 0
    %p109 = por %p107, %p108
    %p110 = scmp.ne.s32.totalorder %s98, %s99
    %p111 = scmp.eq.s32.totalorder %s21, 1
    %p112 = por %p110, %p111
    %p114 = scmp.ne.s32.totalorder %s99, %s113
    %p115 = scmp.eq.s32.totalorder %s21, 0
    %p116 = por %p114, %p115
    %s118 = sadd.s32 %s117, 1
    %p121 = scmp.eq.s32.totalorder %s15, 1
    %p122 = scmp.ne.s32.totalorder %s117, %s119
    %p123 = scmp.eq.s32.totalorder %s15, 0
    %p124 = por %p122, %p123
    %p125 = scmp.ne.s32.totalorder %s117, %s119
    %p126 = scmp.eq.s32.totalorder %s20, 1
    %p127 = por %p125, %p126
    %p128 = scmp.ne.s32.totalorder %s119, %s120
    %p129 = scmp.eq.s32.totalorder %s20, 0
    %p130 = por %p128, %p129
    %p131 = scmp.ne.s32.totalorder %s119, %s120
    %p132 = scmp.eq.s32.totalorder %s21, 1
    %p133 = por %p131, %p132
    %p135 = scmp.ne.s32.totalorder %s120, %s134
    %p136 = scmp.eq.s32.totalorder %s21, 0
    %p137 = por %p135, %p136
    %s139 = sadd.s32 %s138, 1
    %p142 = scmp.eq.s32.totalorder %s15, 1
    %p143 = scmp.ne.s32.totalorder %s138, %s140
    %p144 = scmp.eq.s32.totalorder %s15, 0
    %p145 = por %p143, %p144
    %p146 = scmp.ne.s32.totalorder %s138, %s140
    %p147 = scmp.eq.s32.totalorder %s20, 1
    %p148 = por %p146, %p147
    %p149 = scmp.ne.s32.totalorder %s140, %s141
    %p150 = scmp.eq.s32.totalorder %s20, 0
    %p151 = por %p149, %p150
    %p152 = scmp.ne.s32.totalorder %s140, %s141
    %p153 = scmp.eq.s32.totalorder %s21, 1
    %p154 = por %p152, %p153
    %p156 = scmp.ne.s32.totalorder %s141, %s155
    %p157 = scmp.eq.s32.totalorder %s21, 0
    %p158 = por %p156, %p157
    %s160 = sadd.s32 %s159, 1
    %p163 = scmp.eq.s32.totalorder %s15, 1
    %p164 = scmp.ne.s32.totalorder %s159, %s161
    %p165 = scmp.eq.s32.totalorder %s15, 0
    %p166 = por %p164, %p165
    %p167 = scmp.ne.s32.totalorder %s159, %s161
    %p168 = scmp.eq.s32.totalorder %s20, 1
    %p169 = por %p167, %p168
    %p170 = scmp.ne.s32.totalorder %s161, %s162
    %p171 = scmp.eq.s32.totalorder %s20, 0
    %p172 = por %p170, %p171
    %p173 = scmp.ne.s32.totalorder %s161, %s162
    %p174 = scmp.eq.s32.totalorder %s21, 1
    %p175 = por %p173, %p174
    %p177 = scmp.ne.s32.totalorder %s162, %s176
    %p178 = scmp.eq.s32.totalorder %s21, 0
    %p179 = por %p177, %p178
    %s181 = sadd.s32 %s180, 1
    %p184 = scmp.eq.s32.totalorder %s15, 1
    %p185 = scmp.ne.s32.totalorder %s180, %s182
    %p186 = scmp.eq.s32.totalorder %s15, 0
    %p187 = por %p185, %p186
    %p188 = scmp.ne.s32.totalorder %s180, %s182
    %p189 = scmp.eq.s32.totalorder %s20, 1
    %p190 = por %p188, %p189
    %p191 = scmp.ne.s32.totalorder %s182, %s183
    %p192 = scmp.eq.s32.totalorder %s20, 0
    %p193 = por %p191, %p192
    %p194 = scmp.ne.s32.totalorder %s182, %s183
    %p195 = scmp.eq.s32.totalorder %s21, 1
    %p196 = por %p194, %p195
    %p198 = scmp.ne.s32.totalorder %s183, %s197
    %p199 = scmp.eq.s32.totalorder %s21, 0
    %p200 = por %p198, %p199
    %s202 = sadd.s32 %s201, 1
    %p205 = scmp.eq.s32.totalorder %s15, 1
    %p206 = scmp.ne.s32.totalorder %s201, %s203
    %p207 = scmp.eq.s32.totalorder %s15, 0
    %p208 = por %p206, %p207
    %p209 = scmp.ne.s32.totalorder %s201, %s203
    %p210 = scmp.eq.s32.totalorder %s20, 1
    %p211 = por %p209, %p210
    %p212 = scmp.ne.s32.totalorder %s203, %s204
    %p213 = scmp.eq.s32.totalorder %s20, 0
    %p214 = por %p212, %p213
    %p215 = scmp.ne.s32.totalorder %s203, %s204
    %p216 = scmp.eq.s32.totalorder %s21, 1
    %p217 = por %p215, %p216
    %p219 = scmp.ne.s32.totalorder %s204, %s218
    %p220 = scmp.eq.s32.totalorder %s21, 0
    %p221 = por %p219, %p220
    %s222 = ssub.s32 %s15, %s22
    %p223 = scmp.eq.s32.totalorder %s222, 0
    %s225 = sadd.s32 %s224, 1
    %s226 = scalar_select %p223, %s224, %s225
    %p229 = pneg %p223
    %p230 = scmp.eq.s32.totalorder %s15, 1
    %p231 = por %p229, %p230
    %p232 = scmp.ne.s32.totalorder %s224, %s227
    %p233 = scmp.eq.s32.totalorder %s15, 0
    %p234 = por %p232, %p233
    %p235 = scmp.ne.s32.totalorder %s224, %s227
    %p236 = scmp.eq.s32.totalorder %s20, 1
    %p237 = por %p235, %p236
    %p238 = scmp.ne.s32.totalorder %s227, %s228
    %p239 = scmp.eq.s32.totalorder %s20, 0
    %p240 = por %p238, %p239
    %p241 = scmp.ne.s32.totalorder %s227, %s228
    %p242 = scmp.eq.s32.totalorder %s21, 1
    %p243 = por %p241, %p242
    %p245 = scmp.ne.s32.totalorder %s228, %s244
    %p246 = scmp.eq.s32.totalorder %s21, 0
    %p247 = por %p245, %p246
    %p248 = scmp.le.s32.totalorder 1, %s15
    %p249 = scmp.lt.s32.totalorder %s15, 3
    %p250 = pnand %p248, %p249
    %p251 = pneg %p250
    // Predicated region
    $region9: #{transition_network.1} parent=5 // pred_check
      _
    $region10: #{transition_network.1} parent=5 // pred_check_branch
      %253 = sbr.rel (%p250) target = $region12
    $region11: #{transition_network.1} parent=5 // pred_region
      %s254 = ssub.s32 %s15, 1
      // Predicated region
      $region13: #{transition_network.1} parent=11 // pred_check
        %p255 = pneg %p88
      $region14: #{transition_network.1} parent=11 // pred_check_branch
        %257 = sbr.rel (%p255) target = $region16
      $region15: #{transition_network.1} parent=11 // pred_region
        _
      $region16: #{transition_network.1} parent=11 // pred_fallthru
        _
      // Predicated region
      $region17: #{transition_network.1} parent=11 // pred_check
        %p258 = pneg %p109
      $region18: #{transition_network.1} parent=11 // pred_check_branch
        %260 = sbr.rel (%p258) target = $region20
      $region19: #{transition_network.1} parent=11 // pred_region
        _
      $region20: #{transition_network.1} parent=11 // pred_fallthru
        _
      // Predicated region
      $region21: #{transition_network.1} parent=11 // pred_check
        %p261 = pneg %p130
      $region22: #{transition_network.1} parent=11 // pred_check_branch
        %263 = sbr.rel (%p261) target = $region24
      $region23: #{transition_network.1} parent=11 // pred_region
        _
      $region24: #{transition_network.1} parent=11 // pred_fallthru
        _
      // Predicated region
      $region25: #{transition_network.1} parent=11 // pred_check
        %p264 = pneg %p151
      $region26: #{transition_network.1} parent=11 // pred_check_branch
        %266 = sbr.rel (%p264) target = $region28
      $region27: #{transition_network.1} parent=11 // pred_region
        _
      $region28: #{transition_network.1} parent=11 // pred_fallthru
        _
      // Predicated region
      $region29: #{transition_network.1} parent=11 // pred_check
        %p267 = pneg %p172
      $region30: #{transition_network.1} parent=11 // pred_check_branch
        %269 = sbr.rel (%p267) target = $region32
      $region31: #{transition_network.1} parent=11 // pred_region
        _
      $region32: #{transition_network.1} parent=11 // pred_fallthru
        _
      // Predicated region
      $region33: #{transition_network.1} parent=11 // pred_check
        %p270 = pneg %p193
      $region34: #{transition_network.1} parent=11 // pred_check_branch
        %272 = sbr.rel (%p270) target = $region36
      $region35: #{transition_network.1} parent=11 // pred_region
        _
      $region36: #{transition_network.1} parent=11 // pred_fallthru
        _
      // Predicated region
      $region37: #{transition_network.1} parent=11 // pred_check
        %p273 = pneg %p214
      $region38: #{transition_network.1} parent=11 // pred_check_branch
        %275 = sbr.rel (%p273) target = $region40
      $region39: #{transition_network.1} parent=11 // pred_region
        _
      $region40: #{transition_network.1} parent=11 // pred_fallthru
        _
    $region12: #{transition_network.1} parent=5 // pred_fallthru
      _
    %p276 = scmp.lt.s32.totalorder %s15, 2
    // Predicated region
    $region41: #{transition_network.1} parent=5 // pred_check
      %p277 = pneg %p276
    $region42: #{transition_network.1} parent=5 // pred_check_branch
      %279 = sbr.rel (%p277) target = $region44
    $region43: #{transition_network.1} parent=5 // pred_region
      // Predicated region
      $region45: #{transition_network.1} parent=43 // pred_check
        %p280 = pneg %p35
      $region46: #{transition_network.1} parent=43 // pred_check_branch
        %282 = sbr.rel (%p280) target = $region48
      $region47: #{transition_network.1} parent=43 // pred_region
        %s283 = smul.u32 32, %s15
        %p284 = scmp.lt.s32.totalorder %s283, 63
        %s285 = scalar_select %p284, %s283, 63
        %s286 = smul.addr %s285, 4
        %s287 = scalar_lea.vmem %s0, %s286
        %s288 = smul.u32 32, %s15
      $region48: #{transition_network.1} parent=43 // pred_fallthru
        _
      // Predicated region
      $region49: #{transition_network.1} parent=43 // pred_check
        %p289 = pneg %p61
      $region50: #{transition_network.1} parent=43 // pred_check_branch
        %291 = sbr.rel (%p289) target = $region52
      $region51: #{transition_network.1} parent=43 // pred_region
        %s292 = smul.u32 32, %s15
        %p293 = scmp.lt.s32.totalorder %s292, 63
        %s294 = scalar_select %p293, %s292, 63
        %s295 = smul.addr %s294, 8
        %s296 = scalar_lea.vmem %s1, %s295
        %s297 = smul.u32 32, %s15
      $region52: #{transition_network.1} parent=43 // pred_fallthru
        _
    $region44: #{transition_network.1} parent=5 // pred_fallthru
      _
    %p298 = scmp.le.s32.totalorder 1, %s15
    %p299 = scmp.lt.s32.totalorder %s15, 3
    %p300 = pnand %p298, %p299
    %p301 = pneg %p300
    // Predicated region
    $region53: #{transition_network.1} parent=5 // pred_check
      _
    $region54: #{transition_network.1} parent=5 // pred_check_branch
      %303 = sbr.rel (%p300) target = $region56
    $region55: #{transition_network.1} parent=5 // pred_region
      %s304 = ssub.s32 %s15, 1
      %s305 = smul.u32 32, %s20
      %p306 = scmp.lt.s32.totalorder %s305, 63
      %s307 = scalar_select %p306, %s305, 63
      %s308 = smul.addr %s307, 4
      %s309 = scalar_lea.vmem %s0, %s308
      %p310 = pneg %p41
      %p311 = pneg %p38
      %s312 = smul.u32 32, %s20
      %p313 = scmp.lt.s32.totalorder %s312, 63
      %s314 = scalar_select %p313, %s312, 63
      %s315 = smul.addr %s314, 8
      %s316 = scalar_lea.vmem %s1, %s315
      %p317 = pneg %p67
      %p318 = pneg %p64
      %p319 = pneg %p88
      %p320 = pneg %p85
      %p321 = pneg %p109
      %p322 = pneg %p106
      %p323 = pneg %p130
      %p324 = pneg %p127
      %p325 = pneg %p151
      %p326 = pneg %p148
      %p327 = pneg %p172
      %p328 = pneg %p169
      %p329 = pneg %p193
      %p330 = pneg %p190
      %p331 = pneg %p214
      %p332 = pneg %p211
      %p333 = pneg %p240
      %p334 = pneg %p237
      %s335 = smul.u32 32, %s20
      %p336 = scmp.lt.s32.totalorder %s335, 63
      %s337 = scalar_select %p336, %s335, 63
      %s338 = smul.addr %s337, 8
      %s339 = scalar_lea.vmem %s9, %s338
      %s340 = smul.u32 32, %s20
      %p341 = scmp.lt.s32.totalorder %s340, 63
      %s342 = scalar_select %p341, %s340, 63
      %s343 = smul.addr %s342, 4
      %s344 = scalar_lea.vmem %s0, %s343
      %s345 = smul.u32 32, %s20
      %s346 = smul.u32 32, %s20
      %p347 = scmp.lt.s32.totalorder %s346, 63
      %s348 = scalar_select %p347, %s346, 63
      %s349 = smul.addr %s348, 8
      %s350 = scalar_lea.vmem %s1, %s349
      %s351 = smul.u32 32, %s20
      %s352 = smul.u32 32, %s20
      %p353 = scmp.lt.s32.totalorder %s352, 63
      %s354 = scalar_select %p353, %s352, 63
      %s355 = smul.addr %s354, 8
      %s356 = scalar_lea.vmem %s9, %s355
      %s357 = smul.u32 32, %s20
      %v359 = vld [vmem:[%s344] sm:$0xf]
      %v360 = vld [vmem:[%s344 + $0x4] sm:$0xf]
      %v361 = vld [vmem:[%s344 + $0x8] sm:$0xf]
      %v362 = vld [vmem:[%s344 + $0xc] sm:$0xf]
      %v363 = vld [vmem:[%s344 + $0x10] sm:$0xf]
      %v364 = vld [vmem:[%s344 + $0x14] sm:$0xf]
      %v365 = vld [vmem:[%s344 + $0x18] sm:$0xf]
      %v366 = vld [vmem:[%s344 + $0x1c] sm:$0xf]
      %v367 = vld [vmem:[%s344 + $0x20] sm:$0xf]
      %v368 = vld [vmem:[%s344 + $0x24] sm:$0xf]
      %v369 = vld [vmem:[%s344 + $0x28] sm:$0xf]
      %v370 = vld [vmem:[%s344 + $0x2c] sm:$0xf]
      %v371 = vld [vmem:[%s344 + $0x30] sm:$0xf]
      %v372 = vld [vmem:[%s344 + $0x34] sm:$0xf]
      %v373 = vld [vmem:[%s344 + $0x38] sm:$0xf]
      %v374 = vld [vmem:[%s344 + $0x3c] sm:$0xf]
      %v375 = vld [vmem:[%s344 + $0x40] sm:$0xf]
      %v376 = vld [vmem:[%s344 + $0x44] sm:$0xf]
      %v377 = vld [vmem:[%s344 + $0x48] sm:$0xf]
      %v378 = vld [vmem:[%s344 + $0x4c] sm:$0xf]
      %v379 = vld [vmem:[%s344 + $0x50] sm:$0xf]
      %v380 = vld [vmem:[%s344 + $0x54] sm:$0xf]
      %v381 = vld [vmem:[%s344 + $0x58] sm:$0xf]
      %v382 = vld [vmem:[%s344 + $0x5c] sm:$0xf]
      %v383 = vld [vmem:[%s344 + $0x60] sm:$0xf]
      %v384 = vld [vmem:[%s344 + $0x64] sm:$0xf]
      %v385 = vld [vmem:[%s344 + $0x68] sm:$0xf]
      %v386 = vld [vmem:[%s344 + $0x6c] sm:$0xf]
      %v387 = vld [vmem:[%s344 + $0x70] sm:$0xf]
      %v388 = vld [vmem:[%s344 + $0x74] sm:$0xf]
      %v389 = vld [vmem:[%s344 + $0x78] sm:$0xf]
      %v390 = vld [vmem:[%s344 + $0x7c] sm:$0xf]
      %v391 = vld [vmem:[%s350] sm:$0xff]
      %v392 = vld [vmem:[%s350 + $0x8] sm:$0xff]
      %v393 = vld [vmem:[%s350 + $0x10] sm:$0xff]
      %v394 = vld [vmem:[%s350 + $0x18] sm:$0xff]
      %v395 = vld [vmem:[%s350 + $0x20] sm:$0xff]
      %v396 = vld [vmem:[%s350 + $0x28] sm:$0xff]
      %v397 = vld [vmem:[%s350 + $0x30] sm:$0xff]
      %v398 = vld [vmem:[%s350 + $0x38] sm:$0xff]
      %v399 = vld [vmem:[%s350 + $0x40] sm:$0xff]
      %v400 = vld [vmem:[%s350 + $0x48] sm:$0xff]
      %v401 = vld [vmem:[%s350 + $0x50] sm:$0xff]
      %v402 = vld [vmem:[%s350 + $0x58] sm:$0xff]
      %v403 = vld [vmem:[%s350 + $0x60] sm:$0xff]
      %v404 = vld [vmem:[%s350 + $0x68] sm:$0xff]
      %v405 = vld [vmem:[%s350 + $0x70] sm:$0xff]
      %v406 = vld [vmem:[%s350 + $0x78] sm:$0xff]
      %v407 = vld [vmem:[%s350 + $0x80] sm:$0xff]
      %v408 = vld [vmem:[%s350 + $0x88] sm:$0xff]
      %v409 = vld [vmem:[%s350 + $0x90] sm:$0xff]
      %v410 = vld [vmem:[%s350 + $0x98] sm:$0xff]
      %v411 = vld [vmem:[%s350 + $0xa0] sm:$0xff]
      %v412 = vld [vmem:[%s350 + $0xa8] sm:$0xff]
      %v413 = vld [vmem:[%s350 + $0xb0] sm:$0xff]
      %v414 = vld [vmem:[%s350 + $0xb8] sm:$0xff]
      %v415 = vld [vmem:[%s350 + $0xc0] sm:$0xff]
      %v416 = vld [vmem:[%s350 + $0xc8] sm:$0xff]
      %v417 = vld [vmem:[%s350 + $0xd0] sm:$0xff]
      %v418 = vld [vmem:[%s350 + $0xd8] sm:$0xff]
      %v419 = vld [vmem:[%s350 + $0xe0] sm:$0xff]
      %v420 = vld [vmem:[%s350 + $0xe8] sm:$0xff]
      %v421 = vld [vmem:[%s350 + $0xf0] sm:$0xff]
      %v422 = vld [vmem:[%s350 + $0xf8] sm:$0xff]
      %v423 = vld [vmem:[%s2] sm:$0xf]
      %v424 = vld [vmem:[%s2 + $0x4] sm:$0xf]
      %v425 = vld [vmem:[%s3] sm:$0x3]
      %v426 = vunpack.c.l.bf16 %v425
      %vm427 = vcmp.eq.s32.totalorder %v391, 0
      %vm428 = vcmp.eq.s32.totalorder %v392, 0
      %vm429 = vcmp.eq.s32.totalorder %v393, 0
      %vm430 = vcmp.eq.s32.totalorder %v394, 0
      %vm431 = vcmp.eq.s32.totalorder %v395, 0
      %vm432 = vcmp.eq.s32.totalorder %v396, 0
      %vm433 = vcmp.eq.s32.totalorder %v397, 0
      %vm434 = vcmp.eq.s32.totalorder %v398, 0
      %vm435 = vcmp.eq.s32.totalorder %v399, 0
      %vm436 = vcmp.eq.s32.totalorder %v400, 0
      %vm437 = vcmp.eq.s32.totalorder %v401, 0
      %vm438 = vcmp.eq.s32.totalorder %v402, 0
      %vm439 = vcmp.eq.s32.totalorder %v403, 0
      %vm440 = vcmp.eq.s32.totalorder %v404, 0
      %vm441 = vcmp.eq.s32.totalorder %v405, 0
      %vm442 = vcmp.eq.s32.totalorder %v406, 0
      %vm443 = vcmp.eq.s32.totalorder %v407, 0
      %vm444 = vcmp.eq.s32.totalorder %v408, 0
      %vm445 = vcmp.eq.s32.totalorder %v409, 0
      %vm446 = vcmp.eq.s32.totalorder %v410, 0
      %vm447 = vcmp.eq.s32.totalorder %v411, 0
      %vm448 = vcmp.eq.s32.totalorder %v412, 0
      %vm449 = vcmp.eq.s32.totalorder %v413, 0
      %vm450 = vcmp.eq.s32.totalorder %v414, 0
      %vm451 = vcmp.eq.s32.totalorder %v415, 0
      %vm452 = vcmp.eq.s32.totalorder %v416, 0
      %vm453 = vcmp.eq.s32.totalorder %v417, 0
      %vm454 = vcmp.eq.s32.totalorder %v418, 0
      %vm455 = vcmp.eq.s32.totalorder %v419, 0
      %vm456 = vcmp.eq.s32.totalorder %v420, 0
      %vm457 = vcmp.eq.s32.totalorder %v421, 0
      %vm458 = vcmp.eq.s32.totalorder %v422, 0
      %v459 = vsel %vm427, 1, 0
      %v460 = vsel %vm428, 1, 0
      %v461 = vsel %vm429, 1, 0
      %v462 = vsel %vm430, 1, 0
      %v463 = vsel %vm431, 1, 0
      %v464 = vsel %vm432, 1, 0
      %v465 = vsel %vm433, 1, 0
      %v466 = vsel %vm434, 1, 0
      %v467 = vsel %vm435, 1, 0
      %v468 = vsel %vm436, 1, 0
      %v469 = vsel %vm437, 1, 0
      %v470 = vsel %vm438, 1, 0
      %v471 = vsel %vm439, 1, 0
      %v472 = vsel %vm440, 1, 0
      %v473 = vsel %vm441, 1, 0
      %v474 = vsel %vm442, 1, 0
      %v475 = vsel %vm443, 1, 0
      %v476 = vsel %vm444, 1, 0
      %v477 = vsel %vm445, 1, 0
      %v478 = vsel %vm446, 1, 0
      %v479 = vsel %vm447, 1, 0
      %v480 = vsel %vm448, 1, 0
      %v481 = vsel %vm449, 1, 0
      %v482 = vsel %vm450, 1, 0
      %v483 = vsel %vm451, 1, 0
      %v484 = vsel %vm452, 1, 0
      %v485 = vsel %vm453, 1, 0
      %v486 = vsel %vm454, 1, 0
      %v487 = vsel %vm455, 1, 0
      %v488 = vsel %vm456, 1, 0
      %v489 = vsel %vm457, 1, 0
      %v490 = vsel %vm458, 1, 0
      %v491 = vcvt.s32.f32 %v459
      %v492 = vcvt.s32.f32 %v460
      %v493 = vcvt.s32.f32 %v461
      %v494 = vcvt.s32.f32 %v462
      %v495 = vcvt.s32.f32 %v463
      %v496 = vcvt.s32.f32 %v464
      %v497 = vcvt.s32.f32 %v465
      %v498 = vcvt.s32.f32 %v466
      %v499 = vcvt.s32.f32 %v467
      %v500 = vcvt.s32.f32 %v468
      %v501 = vcvt.s32.f32 %v469
      %v502 = vcvt.s32.f32 %v470
      %v503 = vcvt.s32.f32 %v471
      %v504 = vcvt.s32.f32 %v472
      %v505 = vcvt.s32.f32 %v473
      %v506 = vcvt.s32.f32 %v474
      %v507 = vcvt.s32.f32 %v475
      %v508 = vcvt.s32.f32 %v476
      %v509 = vcvt.s32.f32 %v477
      %v510 = vcvt.s32.f32 %v478
      %v511 = vcvt.s32.f32 %v479
      %v512 = vcvt.s32.f32 %v480
      %v513 = vcvt.s32.f32 %v481
      %v514 = vcvt.s32.f32 %v482
      %v515 = vcvt.s32.f32 %v483
      %v516 = vcvt.s32.f32 %v484
      %v517 = vcvt.s32.f32 %v485
      %v518 = vcvt.s32.f32 %v486
      %v519 = vcvt.s32.f32 %v487
      %v520 = vcvt.s32.f32 %v488
      %v521 = vcvt.s32.f32 %v489
      %v522 = vcvt.s32.f32 %v490
      %524 = vset.pattern.permute.xlu0 0
      %525 = vperm.xlu0 %524, %v491
      %v526 = vpop.permute.xlu0 %525
      %529 = vset.pattern.permute.xlu0 0
      %530 = vperm.xlu0 %529, %v492
      %v531 = vpop.permute.xlu0 %530
      %534 = vset.pattern.permute.xlu0 0
      %535 = vperm.xlu0 %534, %v493
      %v536 = vpop.permute.xlu0 %535
      %539 = vset.pattern.permute.xlu0 0
      %540 = vperm.xlu0 %539, %v494
      %v541 = vpop.permute.xlu0 %540
      %544 = vset.pattern.permute.xlu0 0
      %545 = vperm.xlu0 %544, %v495
      %v546 = vpop.permute.xlu0 %545
      %549 = vset.pattern.permute.xlu0 0
      %550 = vperm.xlu0 %549, %v496
      %v551 = vpop.permute.xlu0 %550
      %554 = vset.pattern.permute.xlu0 0
      %555 = vperm.xlu0 %554, %v497
      %v556 = vpop.permute.xlu0 %555
      %559 = vset.pattern.permute.xlu0 0
      %560 = vperm.xlu0 %559, %v498
      %v561 = vpop.permute.xlu0 %560
      %564 = vset.pattern.permute.xlu0 0
      %565 = vperm.xlu0 %564, %v499
      %v566 = vpop.permute.xlu0 %565
      %569 = vset.pattern.permute.xlu0 0
      %570 = vperm.xlu0 %569, %v500
      %v571 = vpop.permute.xlu0 %570
      %574 = vset.pattern.permute.xlu0 0
      %575 = vperm.xlu0 %574, %v501
      %v576 = vpop.permute.xlu0 %575
      %579 = vset.pattern.permute.xlu0 0
      %580 = vperm.xlu0 %579, %v502
      %v581 = vpop.permute.xlu0 %580
      %584 = vset.pattern.permute.xlu0 0
      %585 = vperm.xlu0 %584, %v503
      %v586 = vpop.permute.xlu0 %585
      %589 = vset.pattern.permute.xlu0 0
      %590 = vperm.xlu0 %589, %v504
      %v591 = vpop.permute.xlu0 %590
      %594 = vset.pattern.permute.xlu0 0
      %595 = vperm.xlu0 %594, %v505
      %v596 = vpop.permute.xlu0 %595
      %599 = vset.pattern.permute.xlu0 0
      %600 = vperm.xlu0 %599, %v506
      %v601 = vpop.permute.xlu0 %600
      %604 = vset.pattern.permute.xlu0 0
      %605 = vperm.xlu0 %604, %v507
      %v606 = vpop.permute.xlu0 %605
      %609 = vset.pattern.permute.xlu0 0
      %610 = vperm.xlu0 %609, %v508
      %v611 = vpop.permute.xlu0 %610
      %614 = vset.pattern.permute.xlu0 0
      %615 = vperm.xlu0 %614, %v509
      %v616 = vpop.permute.xlu0 %615
      %619 = vset.pattern.permute.xlu0 0
      %620 = vperm.xlu0 %619, %v510
      %v621 = vpop.permute.xlu0 %620
      %624 = vset.pattern.permute.xlu0 0
      %625 = vperm.xlu0 %624, %v511
      %v626 = vpop.permute.xlu0 %625
      %629 = vset.pattern.permute.xlu0 0
      %630 = vperm.xlu0 %629, %v512
      %v631 = vpop.permute.xlu0 %630
      %634 = vset.pattern.permute.xlu0 0
      %635 = vperm.xlu0 %634, %v513
      %v636 = vpop.permute.xlu0 %635
      %639 = vset.pattern.permute.xlu0 0
      %640 = vperm.xlu0 %639, %v514
      %v641 = vpop.permute.xlu0 %640
      %644 = vset.pattern.permute.xlu0 0
      %645 = vperm.xlu0 %644, %v515
      %v646 = vpop.permute.xlu0 %645
      %649 = vset.pattern.permute.xlu0 0
      %650 = vperm.xlu0 %649, %v516
      %v651 = vpop.permute.xlu0 %650
      %654 = vset.pattern.permute.xlu0 0
      %655 = vperm.xlu0 %654, %v517
      %v656 = vpop.permute.xlu0 %655
      %659 = vset.pattern.permute.xlu0 0
      %660 = vperm.xlu0 %659, %v518
      %v661 = vpop.permute.xlu0 %660
      %664 = vset.pattern.permute.xlu0 0
      %665 = vperm.xlu0 %664, %v519
      %v666 = vpop.permute.xlu0 %665
      %669 = vset.pattern.permute.xlu0 0
      %670 = vperm.xlu0 %669, %v520
      %v671 = vpop.permute.xlu0 %670
      %674 = vset.pattern.permute.xlu0 0
      %675 = vperm.xlu0 %674, %v521
      %v676 = vpop.permute.xlu0 %675
      %679 = vset.pattern.permute.xlu0 0
      %680 = vperm.xlu0 %679, %v522
      %v681 = vpop.permute.xlu0 %680
      %v683 = vperm.slane %v426, 0
      %v684 = vmul.f32 %v526, %v683
      %v685 = vmul.f32 %v531, %v683
      %v686 = vmul.f32 %v536, %v683
      %v687 = vmul.f32 %v541, %v683
      %v688 = vmul.f32 %v546, %v683
      %v689 = vmul.f32 %v551, %v683
      %v690 = vmul.f32 %v556, %v683
      %v691 = vmul.f32 %v561, %v683
      %v692 = vmul.f32 %v566, %v683
      %v693 = vmul.f32 %v571, %v683
      %v694 = vmul.f32 %v576, %v683
      %v695 = vmul.f32 %v581, %v683
      %v696 = vmul.f32 %v586, %v683
      %v697 = vmul.f32 %v591, %v683
      %v698 = vmul.f32 %v596, %v683
      %v699 = vmul.f32 %v601, %v683
      %v700 = vmul.f32 %v606, %v683
      %v701 = vmul.f32 %v611, %v683
      %v702 = vmul.f32 %v616, %v683
      %v703 = vmul.f32 %v621, %v683
      %v704 = vmul.f32 %v626, %v683
      %v705 = vmul.f32 %v631, %v683
      %v706 = vmul.f32 %v636, %v683
      %v707 = vmul.f32 %v641, %v683
      %v708 = vmul.f32 %v646, %v683
      %v709 = vmul.f32 %v651, %v683
      %v710 = vmul.f32 %v656, %v683
      %v711 = vmul.f32 %v661, %v683
      %v712 = vmul.f32 %v666, %v683
      %v713 = vmul.f32 %v671, %v683
      %v714 = vmul.f32 %v676, %v683
      %v715 = vmul.f32 %v681, %v683
      %v716 = vadd.f32 %v684, 0.0
      %v717 = vadd.f32 %v685, 0.0
      %v718 = vadd.f32 %v686, 0.0
      %v719 = vadd.f32 %v687, 0.0
      %v720 = vadd.f32 %v688, 0.0
      %v721 = vadd.f32 %v689, 0.0
      %v722 = vadd.f32 %v690, 0.0
      %v723 = vadd.f32 %v691, 0.0
      %v724 = vadd.f32 %v692, 0.0
      %v725 = vadd.f32 %v693, 0.0
      %v726 = vadd.f32 %v694, 0.0
      %v727 = vadd.f32 %v695, 0.0
      %v728 = vadd.f32 %v696, 0.0
      %v729 = vadd.f32 %v697, 0.0
      %v730 = vadd.f32 %v698, 0.0
      %v731 = vadd.f32 %v699, 0.0
      %v732 = vadd.f32 %v700, 0.0
      %v733 = vadd.f32 %v701, 0.0
      %v734 = vadd.f32 %v702, 0.0
      %v735 = vadd.f32 %v703, 0.0
      %v736 = vadd.f32 %v704, 0.0
      %v737 = vadd.f32 %v705, 0.0
      %v738 = vadd.f32 %v706, 0.0
      %v739 = vadd.f32 %v707, 0.0
      %v740 = vadd.f32 %v708, 0.0
      %v741 = vadd.f32 %v709, 0.0
      %v742 = vadd.f32 %v710, 0.0
      %v743 = vadd.f32 %v711, 0.0
      %v744 = vadd.f32 %v712, 0.0
      %v745 = vadd.f32 %v713, 0.0
      %v746 = vadd.f32 %v714, 0.0
      %v747 = vadd.f32 %v715, 0.0
      %vm748 = vcmp.eq.s32.totalorder %v391, 1
      %vm749 = vcmp.eq.s32.totalorder %v392, 1
      %vm750 = vcmp.eq.s32.totalorder %v393, 1
      %vm751 = vcmp.eq.s32.totalorder %v394, 1
      %vm752 = vcmp.eq.s32.totalorder %v395, 1
      %vm753 = vcmp.eq.s32.totalorder %v396, 1
      %vm754 = vcmp.eq.s32.totalorder %v397, 1
      %vm755 = vcmp.eq.s32.totalorder %v398, 1
      %vm756 = vcmp.eq.s32.totalorder %v399, 1
      %vm757 = vcmp.eq.s32.totalorder %v400, 1
      %vm758 = vcmp.eq.s32.totalorder %v401, 1
      %vm759 = vcmp.eq.s32.totalorder %v402, 1
      %vm760 = vcmp.eq.s32.totalorder %v403, 1
      %vm761 = vcmp.eq.s32.totalorder %v404, 1
      %vm762 = vcmp.eq.s32.totalorder %v405, 1
      %vm763 = vcmp.eq.s32.totalorder %v406, 1
      %vm764 = vcmp.eq.s32.totalorder %v407, 1
      %vm765 = vcmp.eq.s32.totalorder %v408, 1
      %vm766 = vcmp.eq.s32.totalorder %v409, 1
      %vm767 = vcmp.eq.s32.totalorder %v410, 1
      %vm768 = vcmp.eq.s32.totalorder %v411, 1
      %vm769 = vcmp.eq.s32.totalorder %v412, 1
      %vm770 = vcmp.eq.s32.totalorder %v413, 1
      %vm771 = vcmp.eq.s32.totalorder %v414, 1
      %vm772 = vcmp.eq.s32.totalorder %v415, 1
      %vm773 = vcmp.eq.s32.totalorder %v416, 1
      %vm774 = vcmp.eq.s32.totalorder %v417, 1
      %vm775 = vcmp.eq.s32.totalorder %v418, 1
      %vm776 = vcmp.eq.s32.totalorder %v419, 1
      %vm777 = vcmp.eq.s32.totalorder %v420, 1
      %vm778 = vcmp.eq.s32.totalorder %v421, 1
      %vm779 = vcmp.eq.s32.totalorder %v422, 1
      %v780 = vsel %vm748, 1, 0
      %v781 = vsel %vm749, 1, 0
      %v782 = vsel %vm750, 1, 0
      %v783 = vsel %vm751, 1, 0
      %v784 = vsel %vm752, 1, 0
      %v785 = vsel %vm753, 1, 0
      %v786 = vsel %vm754, 1, 0
      %v787 = vsel %vm755, 1, 0
      %v788 = vsel %vm756, 1, 0
      %v789 = vsel %vm757, 1, 0
      %v790 = vsel %vm758, 1, 0
      %v791 = vsel %vm759, 1, 0
      %v792 = vsel %vm760, 1, 0
      %v793 = vsel %vm761, 1, 0
      %v794 = vsel %vm762, 1, 0
      %v795 = vsel %vm763, 1, 0
      %v796 = vsel %vm764, 1, 0
      %v797 = vsel %vm765, 1, 0
      %v798 = vsel %vm766, 1, 0
      %v799 = vsel %vm767, 1, 0
      %v800 = vsel %vm768, 1, 0
      %v801 = vsel %vm769, 1, 0
      %v802 = vsel %vm770, 1, 0
      %v803 = vsel %vm771, 1, 0
      %v804 = vsel %vm772, 1, 0
      %v805 = vsel %vm773, 1, 0
      %v806 = vsel %vm774, 1, 0
      %v807 = vsel %vm775, 1, 0
      %v808 = vsel %vm776, 1, 0
      %v809 = vsel %vm777, 1, 0
      %v810 = vsel %vm778, 1, 0
      %v811 = vsel %vm779, 1, 0
      %v812 = vcvt.s32.f32 %v780
      %v813 = vcvt.s32.f32 %v781
      %v814 = vcvt.s32.f32 %v782
      %v815 = vcvt.s32.f32 %v783
      %v816 = vcvt.s32.f32 %v784
      %v817 = vcvt.s32.f32 %v785
      %v818 = vcvt.s32.f32 %v786
      %v819 = vcvt.s32.f32 %v787
      %v820 = vcvt.s32.f32 %v788
      %v821 = vcvt.s32.f32 %v789
      %v822 = vcvt.s32.f32 %v790
      %v823 = vcvt.s32.f32 %v791
      %v824 = vcvt.s32.f32 %v792
      %v825 = vcvt.s32.f32 %v793
      %v826 = vcvt.s32.f32 %v794
      %v827 = vcvt.s32.f32 %v795
      %v828 = vcvt.s32.f32 %v796
      %v829 = vcvt.s32.f32 %v797
      %v830 = vcvt.s32.f32 %v798
      %v831 = vcvt.s32.f32 %v799
      %v832 = vcvt.s32.f32 %v800
      %v833 = vcvt.s32.f32 %v801
      %v834 = vcvt.s32.f32 %v802
      %v835 = vcvt.s32.f32 %v803
      %v836 = vcvt.s32.f32 %v804
      %v837 = vcvt.s32.f32 %v805
      %v838 = vcvt.s32.f32 %v806
      %v839 = vcvt.s32.f32 %v807
      %v840 = vcvt.s32.f32 %v808
      %v841 = vcvt.s32.f32 %v809
      %v842 = vcvt.s32.f32 %v810
      %v843 = vcvt.s32.f32 %v811
      %845 = vset.pattern.permute.xlu0 0
      %846 = vperm.xlu0 %845, %v812
      %v847 = vpop.permute.xlu0 %846
      %850 = vset.pattern.permute.xlu0 0
      %851 = vperm.xlu0 %850, %v813
      %v852 = vpop.permute.xlu0 %851
      %855 = vset.pattern.permute.xlu0 0
      %856 = vperm.xlu0 %855, %v814
      %v857 = vpop.permute.xlu0 %856
      %860 = vset.pattern.permute.xlu0 0
      %861 = vperm.xlu0 %860, %v815
      %v862 = vpop.permute.xlu0 %861
      %865 = vset.pattern.permute.xlu0 0
      %866 = vperm.xlu0 %865, %v816
      %v867 = vpop.permute.xlu0 %866
      %870 = vset.pattern.permute.xlu0 0
      %871 = vperm.xlu0 %870, %v817
      %v872 = vpop.permute.xlu0 %871
      %875 = vset.pattern.permute.xlu0 0
      %876 = vperm.xlu0 %875, %v818
      %v877 = vpop.permute.xlu0 %876
      %880 = vset.pattern.permute.xlu0 0
      %881 = vperm.xlu0 %880, %v819
      %v882 = vpop.permute.xlu0 %881
      %885 = vset.pattern.permute.xlu0 0
      %886 = vperm.xlu0 %885, %v820
      %v887 = vpop.permute.xlu0 %886
      %890 = vset.pattern.permute.xlu0 0
      %891 = vperm.xlu0 %890, %v821
      %v892 = vpop.permute.xlu0 %891
      %895 = vset.pattern.permute.xlu0 0
      %896 = vperm.xlu0 %895, %v822
      %v897 = vpop.permute.xlu0 %896
      %900 = vset.pattern.permute.xlu0 0
      %901 = vperm.xlu0 %900, %v823
      %v902 = vpop.permute.xlu0 %901
      %905 = vset.pattern.permute.xlu0 0
      %906 = vperm.xlu0 %905, %v824
      %v907 = vpop.permute.xlu0 %906
      %910 = vset.pattern.permute.xlu0 0
      %911 = vperm.xlu0 %910, %v825
      %v912 = vpop.permute.xlu0 %911
      %915 = vset.pattern.permute.xlu0 0
      %916 = vperm.xlu0 %915, %v826
      %v917 = vpop.permute.xlu0 %916
      %920 = vset.pattern.permute.xlu0 0
      %921 = vperm.xlu0 %920, %v827
      %v922 = vpop.permute.xlu0 %921
      %925 = vset.pattern.permute.xlu0 0
      %926 = vperm.xlu0 %925, %v828
      %v927 = vpop.permute.xlu0 %926
      %930 = vset.pattern.permute.xlu0 0
      %931 = vperm.xlu0 %930, %v829
      %v932 = vpop.permute.xlu0 %931
      %935 = vset.pattern.permute.xlu0 0
      %936 = vperm.xlu0 %935, %v830
      %v937 = vpop.permute.xlu0 %936
      %940 = vset.pattern.permute.xlu0 0
      %941 = vperm.xlu0 %940, %v831
      %v942 = vpop.permute.xlu0 %941
      %945 = vset.pattern.permute.xlu0 0
      %946 = vperm.xlu0 %945, %v832
      %v947 = vpop.permute.xlu0 %946
      %950 = vset.pattern.permute.xlu0 0
      %951 = vperm.xlu0 %950, %v833
      %v952 = vpop.permute.xlu0 %951
      %955 = vset.pattern.permute.xlu0 0
      %956 = vperm.xlu0 %955, %v834
      %v957 = vpop.permute.xlu0 %956
      %960 = vset.pattern.permute.xlu0 0
      %961 = vperm.xlu0 %960, %v835
      %v962 = vpop.permute.xlu0 %961
      %965 = vset.pattern.permute.xlu0 0
      %966 = vperm.xlu0 %965, %v836
      %v967 = vpop.permute.xlu0 %966
      %970 = vset.pattern.permute.xlu0 0
      %971 = vperm.xlu0 %970, %v837
      %v972 = vpop.permute.xlu0 %971
      %975 = vset.pattern.permute.xlu0 0
      %976 = vperm.xlu0 %975, %v838
      %v977 = vpop.permute.xlu0 %976
      %980 = vset.pattern.permute.xlu0 0
      %981 = vperm.xlu0 %980, %v839
      %v982 = vpop.permute.xlu0 %981
      %985 = vset.pattern.permute.xlu0 0
      %986 = vperm.xlu0 %985, %v840
      %v987 = vpop.permute.xlu0 %986
      %990 = vset.pattern.permute.xlu0 0
      %991 = vperm.xlu0 %990, %v841
      %v992 = vpop.permute.xlu0 %991
      %995 = vset.pattern.permute.xlu0 0
      %996 = vperm.xlu0 %995, %v842
      %v997 = vpop.permute.xlu0 %996
      %1000 = vset.pattern.permute.xlu0 0
      %1001 = vperm.xlu0 %1000, %v843
      %v1002 = vpop.permute.xlu0 %1001
      %v1004 = vperm.slane %v426, 1
      %v1005 = vmul.f32 %v847, %v1004
      %v1006 = vmul.f32 %v852, %v1004
      %v1007 = vmul.f32 %v857, %v1004
      %v1008 = vmul.f32 %v862, %v1004
      %v1009 = vmul.f32 %v867, %v1004
      %v1010 = vmul.f32 %v872, %v1004
      %v1011 = vmul.f32 %v877, %v1004
      %v1012 = vmul.f32 %v882, %v1004
      %v1013 = vmul.f32 %v887, %v1004
      %v1014 = vmul.f32 %v892, %v1004
      %v1015 = vmul.f32 %v897, %v1004
      %v1016 = vmul.f32 %v902, %v1004
      %v1017 = vmul.f32 %v907, %v1004
      %v1018 = vmul.f32 %v912, %v1004
      %v1019 = vmul.f32 %v917, %v1004
      %v1020 = vmul.f32 %v922, %v1004
      %v1021 = vmul.f32 %v927, %v1004
      %v1022 = vmul.f32 %v932, %v1004
      %v1023 = vmul.f32 %v937, %v1004
      %v1024 = vmul.f32 %v942, %v1004
      %v1025 = vmul.f32 %v947, %v1004
      %v1026 = vmul.f32 %v952, %v1004
      %v1027 = vmul.f32 %v957, %v1004
      %v1028 = vmul.f32 %v962, %v1004
      %v1029 = vmul.f32 %v967, %v1004
      %v1030 = vmul.f32 %v972, %v1004
      %v1031 = vmul.f32 %v977, %v1004
      %v1032 = vmul.f32 %v982, %v1004
      %v1033 = vmul.f32 %v987, %v1004
      %v1034 = vmul.f32 %v992, %v1004
      %v1035 = vmul.f32 %v997, %v1004
      %v1036 = vmul.f32 %v1002, %v1004
      %v1037 = vadd.f32 %v716, %v1005
      %v1038 = vadd.f32 %v717, %v1006
      %v1039 = vadd.f32 %v718, %v1007
      %v1040 = vadd.f32 %v719, %v1008
      %v1041 = vadd.f32 %v720, %v1009
      %v1042 = vadd.f32 %v721, %v1010
      %v1043 = vadd.f32 %v722, %v1011
      %v1044 = vadd.f32 %v723, %v1012
      %v1045 = vadd.f32 %v724, %v1013
      %v1046 = vadd.f32 %v725, %v1014
      %v1047 = vadd.f32 %v726, %v1015
      %v1048 = vadd.f32 %v727, %v1016
      %v1049 = vadd.f32 %v728, %v1017
      %v1050 = vadd.f32 %v729, %v1018
      %v1051 = vadd.f32 %v730, %v1019
      %v1052 = vadd.f32 %v731, %v1020
      %v1053 = vadd.f32 %v732, %v1021
      %v1054 = vadd.f32 %v733, %v1022
      %v1055 = vadd.f32 %v734, %v1023
      %v1056 = vadd.f32 %v735, %v1024
      %v1057 = vadd.f32 %v736, %v1025
      %v1058 = vadd.f32 %v737, %v1026
      %v1059 = vadd.f32 %v738, %v1027
      %v1060 = vadd.f32 %v739, %v1028
      %v1061 = vadd.f32 %v740, %v1029
      %v1062 = vadd.f32 %v741, %v1030
      %v1063 = vadd.f32 %v742, %v1031
      %v1064 = vadd.f32 %v743, %v1032
      %v1065 = vadd.f32 %v744, %v1033
      %v1066 = vadd.f32 %v745, %v1034
      %v1067 = vadd.f32 %v746, %v1035
      %v1068 = vadd.f32 %v747, %v1036
      %vm1069 = vcmp.eq.s32.totalorder %v391, 2
      %vm1070 = vcmp.eq.s32.totalorder %v392, 2
      %vm1071 = vcmp.eq.s32.totalorder %v393, 2
      %vm1072 = vcmp.eq.s32.totalorder %v394, 2
      %vm1073 = vcmp.eq.s32.totalorder %v395, 2
      %vm1074 = vcmp.eq.s32.totalorder %v396, 2
      %vm1075 = vcmp.eq.s32.totalorder %v397, 2
      %vm1076 = vcmp.eq.s32.totalorder %v398, 2
      %vm1077 = vcmp.eq.s32.totalorder %v399, 2
      %vm1078 = vcmp.eq.s32.totalorder %v400, 2
      %vm1079 = vcmp.eq.s32.totalorder %v401, 2
      %vm1080 = vcmp.eq.s32.totalorder %v402, 2
      %vm1081 = vcmp.eq.s32.totalorder %v403, 2
      %vm1082 = vcmp.eq.s32.totalorder %v404, 2
      %vm1083 = vcmp.eq.s32.totalorder %v405, 2
      %vm1084 = vcmp.eq.s32.totalorder %v406, 2
      %vm1085 = vcmp.eq.s32.totalorder %v407, 2
      %vm1086 = vcmp.eq.s32.totalorder %v408, 2
      %vm1087 = vcmp.eq.s32.totalorder %v409, 2
      %vm1088 = vcmp.eq.s32.totalorder %v410, 2
      %vm1089 = vcmp.eq.s32.totalorder %v411, 2
      %vm1090 = vcmp.eq.s32.totalorder %v412, 2
      %vm1091 = vcmp.eq.s32.totalorder %v413, 2
      %vm1092 = vcmp.eq.s32.totalorder %v414, 2
      %vm1093 = vcmp.eq.s32.totalorder %v415, 2
      %vm1094 = vcmp.eq.s32.totalorder %v416, 2
      %vm1095 = vcmp.eq.s32.totalorder %v417, 2
      %vm1096 = vcmp.eq.s32.totalorder %v418, 2
      %vm1097 = vcmp.eq.s32.totalorder %v419, 2
      %vm1098 = vcmp.eq.s32.totalorder %v420, 2
      %vm1099 = vcmp.eq.s32.totalorder %v421, 2
      %vm1100 = vcmp.eq.s32.totalorder %v422, 2
      %v1101 = vsel %vm1069, 1, 0
      %v1102 = vsel %vm1070, 1, 0
      %v1103 = vsel %vm1071, 1, 0
      %v1104 = vsel %vm1072, 1, 0
      %v1105 = vsel %vm1073, 1, 0
      %v1106 = vsel %vm1074, 1, 0
      %v1107 = vsel %vm1075, 1, 0
      %v1108 = vsel %vm1076, 1, 0
      %v1109 = vsel %vm1077, 1, 0
      %v1110 = vsel %vm1078, 1, 0
      %v1111 = vsel %vm1079, 1, 0
      %v1112 = vsel %vm1080, 1, 0
      %v1113 = vsel %vm1081, 1, 0
      %v1114 = vsel %vm1082, 1, 0
      %v1115 = vsel %vm1083, 1, 0
      %v1116 = vsel %vm1084, 1, 0
      %v1117 = vsel %vm1085, 1, 0
      %v1118 = vsel %vm1086, 1, 0
      %v1119 = vsel %vm1087, 1, 0
      %v1120 = vsel %vm1088, 1, 0
      %v1121 = vsel %vm1089, 1, 0
      %v1122 = vsel %vm1090, 1, 0
      %v1123 = vsel %vm1091, 1, 0
      %v1124 = vsel %vm1092, 1, 0
      %v1125 = vsel %vm1093, 1, 0
      %v1126 = vsel %vm1094, 1, 0
      %v1127 = vsel %vm1095, 1, 0
      %v1128 = vsel %vm1096, 1, 0
      %v1129 = vsel %vm1097, 1, 0
      %v1130 = vsel %vm1098, 1, 0
      %v1131 = vsel %vm1099, 1, 0
      %v1132 = vsel %vm1100, 1, 0
      %v1133 = vcvt.s32.f32 %v1101
      %v1134 = vcvt.s32.f32 %v1102
      %v1135 = vcvt.s32.f32 %v1103
      %v1136 = vcvt.s32.f32 %v1104
      %v1137 = vcvt.s32.f32 %v1105
      %v1138 = vcvt.s32.f32 %v1106
      %v1139 = vcvt.s32.f32 %v1107
      %v1140 = vcvt.s32.f32 %v1108
      %v1141 = vcvt.s32.f32 %v1109
      %v1142 = vcvt.s32.f32 %v1110
      %v1143 = vcvt.s32.f32 %v1111
      %v1144 = vcvt.s32.f32 %v1112
      %v1145 = vcvt.s32.f32 %v1113
      %v1146 = vcvt.s32.f32 %v1114
      %v1147 = vcvt.s32.f32 %v1115
      %v1148 = vcvt.s32.f32 %v1116
      %v1149 = vcvt.s32.f32 %v1117
      %v1150 = vcvt.s32.f32 %v1118
      %v1151 = vcvt.s32.f32 %v1119
      %v1152 = vcvt.s32.f32 %v1120
      %v1153 = vcvt.s32.f32 %v1121
      %v1154 = vcvt.s32.f32 %v1122
      %v1155 = vcvt.s32.f32 %v1123
      %v1156 = vcvt.s32.f32 %v1124
      %v1157 = vcvt.s32.f32 %v1125
      %v1158 = vcvt.s32.f32 %v1126
      %v1159 = vcvt.s32.f32 %v1127
      %v1160 = vcvt.s32.f32 %v1128
      %v1161 = vcvt.s32.f32 %v1129
      %v1162 = vcvt.s32.f32 %v1130
      %v1163 = vcvt.s32.f32 %v1131
      %v1164 = vcvt.s32.f32 %v1132
      %1166 = vset.pattern.permute.xlu0 0
      %1167 = vperm.xlu0 %1166, %v1133
      %v1168 = vpop.permute.xlu0 %1167
      %1171 = vset.pattern.permute.xlu0 0
      %1172 = vperm.xlu0 %1171, %v1134
      %v1173 = vpop.permute.xlu0 %1172
      %1176 = vset.pattern.permute.xlu0 0
      %1177 = vperm.xlu0 %1176, %v1135
      %v1178 = vpop.permute.xlu0 %1177
      %1181 = vset.pattern.permute.xlu0 0
      %1182 = vperm.xlu0 %1181, %v1136
      %v1183 = vpop.permute.xlu0 %1182
      %1186 = vset.pattern.permute.xlu0 0
      %1187 = vperm.xlu0 %1186, %v1137
      %v1188 = vpop.permute.xlu0 %1187
      %1191 = vset.pattern.permute.xlu0 0
      %1192 = vperm.xlu0 %1191, %v1138
      %v1193 = vpop.permute.xlu0 %1192
      %1196 = vset.pattern.permute.xlu0 0
      %1197 = vperm.xlu0 %1196, %v1139
      %v1198 = vpop.permute.xlu0 %1197
      %1201 = vset.pattern.permute.xlu0 0
      %1202 = vperm.xlu0 %1201, %v1140
      %v1203 = vpop.permute.xlu0 %1202
      %1206 = vset.pattern.permute.xlu0 0
      %1207 = vperm.xlu0 %1206, %v1141
      %v1208 = vpop.permute.xlu0 %1207
      %1211 = vset.pattern.permute.xlu0 0
      %1212 = vperm.xlu0 %1211, %v1142
      %v1213 = vpop.permute.xlu0 %1212
      %1216 = vset.pattern.permute.xlu0 0
      %1217 = vperm.xlu0 %1216, %v1143
      %v1218 = vpop.permute.xlu0 %1217
      %1221 = vset.pattern.permute.xlu0 0
      %1222 = vperm.xlu0 %1221, %v1144
      %v1223 = vpop.permute.xlu0 %1222
      %1226 = vset.pattern.permute.xlu0 0
      %1227 = vperm.xlu0 %1226, %v1145
      %v1228 = vpop.permute.xlu0 %1227
      %1231 = vset.pattern.permute.xlu0 0
      %1232 = vperm.xlu0 %1231, %v1146
      %v1233 = vpop.permute.xlu0 %1232
      %1236 = vset.pattern.permute.xlu0 0
      %1237 = vperm.xlu0 %1236, %v1147
      %v1238 = vpop.permute.xlu0 %1237
      %1241 = vset.pattern.permute.xlu0 0
      %1242 = vperm.xlu0 %1241, %v1148
      %v1243 = vpop.permute.xlu0 %1242
      %1246 = vset.pattern.permute.xlu0 0
      %1247 = vperm.xlu0 %1246, %v1149
      %v1248 = vpop.permute.xlu0 %1247
      %1251 = vset.pattern.permute.xlu0 0
      %1252 = vperm.xlu0 %1251, %v1150
      %v1253 = vpop.permute.xlu0 %1252
      %1256 = vset.pattern.permute.xlu0 0
      %1257 = vperm.xlu0 %1256, %v1151
      %v1258 = vpop.permute.xlu0 %1257
      %1261 = vset.pattern.permute.xlu0 0
      %1262 = vperm.xlu0 %1261, %v1152
      %v1263 = vpop.permute.xlu0 %1262
      %1266 = vset.pattern.permute.xlu0 0
      %1267 = vperm.xlu0 %1266, %v1153
      %v1268 = vpop.permute.xlu0 %1267
      %1271 = vset.pattern.permute.xlu0 0
      %1272 = vperm.xlu0 %1271, %v1154
      %v1273 = vpop.permute.xlu0 %1272
      %1276 = vset.pattern.permute.xlu0 0
      %1277 = vperm.xlu0 %1276, %v1155
      %v1278 = vpop.permute.xlu0 %1277
      %1281 = vset.pattern.permute.xlu0 0
      %1282 = vperm.xlu0 %1281, %v1156
      %v1283 = vpop.permute.xlu0 %1282
      %1286 = vset.pattern.permute.xlu0 0
      %1287 = vperm.xlu0 %1286, %v1157
      %v1288 = vpop.permute.xlu0 %1287
      %1291 = vset.pattern.permute.xlu0 0
      %1292 = vperm.xlu0 %1291, %v1158
      %v1293 = vpop.permute.xlu0 %1292
      %1296 = vset.pattern.permute.xlu0 0
      %1297 = vperm.xlu0 %1296, %v1159
      %v1298 = vpop.permute.xlu0 %1297
      %1301 = vset.pattern.permute.xlu0 0
      %1302 = vperm.xlu0 %1301, %v1160
      %v1303 = vpop.permute.xlu0 %1302
      %1306 = vset.pattern.permute.xlu0 0
      %1307 = vperm.xlu0 %1306, %v1161
      %v1308 = vpop.permute.xlu0 %1307
      %1311 = vset.pattern.permute.xlu0 0
      %1312 = vperm.xlu0 %1311, %v1162
      %v1313 = vpop.permute.xlu0 %1312
      %1316 = vset.pattern.permute.xlu0 0
      %1317 = vperm.xlu0 %1316, %v1163
      %v1318 = vpop.permute.xlu0 %1317
      %1321 = vset.pattern.permute.xlu0 0
      %1322 = vperm.xlu0 %1321, %v1164
      %v1323 = vpop.permute.xlu0 %1322
      %v1325 = vperm.slane %v426, 2
      %v1326 = vmul.f32 %v1168, %v1325
      %v1327 = vmul.f32 %v1173, %v1325
      %v1328 = vmul.f32 %v1178, %v1325
      %v1329 = vmul.f32 %v1183, %v1325
      %v1330 = vmul.f32 %v1188, %v1325
      %v1331 = vmul.f32 %v1193, %v1325
      %v1332 = vmul.f32 %v1198, %v1325
      %v1333 = vmul.f32 %v1203, %v1325
      %v1334 = vmul.f32 %v1208, %v1325
      %v1335 = vmul.f32 %v1213, %v1325
      %v1336 = vmul.f32 %v1218, %v1325
      %v1337 = vmul.f32 %v1223, %v1325
      %v1338 = vmul.f32 %v1228, %v1325
      %v1339 = vmul.f32 %v1233, %v1325
      %v1340 = vmul.f32 %v1238, %v1325
      %v1341 = vmul.f32 %v1243, %v1325
      %v1342 = vmul.f32 %v1248, %v1325
      %v1343 = vmul.f32 %v1253, %v1325
      %v1344 = vmul.f32 %v1258, %v1325
      %v1345 = vmul.f32 %v1263, %v1325
      %v1346 = vmul.f32 %v1268, %v1325
      %v1347 = vmul.f32 %v1273, %v1325
      %v1348 = vmul.f32 %v1278, %v1325
      %v1349 = vmul.f32 %v1283, %v1325
      %v1350 = vmul.f32 %v1288, %v1325
      %v1351 = vmul.f32 %v1293, %v1325
      %v1352 = vmul.f32 %v1298, %v1325
      %v1353 = vmul.f32 %v1303, %v1325
      %v1354 = vmul.f32 %v1308, %v1325
      %v1355 = vmul.f32 %v1313, %v1325
      %v1356 = vmul.f32 %v1318, %v1325
      %v1357 = vmul.f32 %v1323, %v1325
      %v1358 = vadd.f32 %v1037, %v1326
      %v1359 = vadd.f32 %v1038, %v1327
      %v1360 = vadd.f32 %v1039, %v1328
      %v1361 = vadd.f32 %v1040, %v1329
      %v1362 = vadd.f32 %v1041, %v1330
      %v1363 = vadd.f32 %v1042, %v1331
      %v1364 = vadd.f32 %v1043, %v1332
      %v1365 = vadd.f32 %v1044, %v1333
      %v1366 = vadd.f32 %v1045, %v1334
      %v1367 = vadd.f32 %v1046, %v1335
      %v1368 = vadd.f32 %v1047, %v1336
      %v1369 = vadd.f32 %v1048, %v1337
      %v1370 = vadd.f32 %v1049, %v1338
      %v1371 = vadd.f32 %v1050, %v1339
      %v1372 = vadd.f32 %v1051, %v1340
      %v1373 = vadd.f32 %v1052, %v1341
      %v1374 = vadd.f32 %v1053, %v1342
      %v1375 = vadd.f32 %v1054, %v1343
      %v1376 = vadd.f32 %v1055, %v1344
      %v1377 = vadd.f32 %v1056, %v1345
      %v1378 = vadd.f32 %v1057, %v1346
      %v1379 = vadd.f32 %v1058, %v1347
      %v1380 = vadd.f32 %v1059, %v1348
      %v1381 = vadd.f32 %v1060, %v1349
      %v1382 = vadd.f32 %v1061, %v1350
      %v1383 = vadd.f32 %v1062, %v1351
      %v1384 = vadd.f32 %v1063, %v1352
      %v1385 = vadd.f32 %v1064, %v1353
      %v1386 = vadd.f32 %v1065, %v1354
      %v1387 = vadd.f32 %v1066, %v1355
      %v1388 = vadd.f32 %v1067, %v1356
      %v1389 = vadd.f32 %v1068, %v1357
      %vm1390 = vcmp.eq.s32.totalorder %v391, 3
      %vm1391 = vcmp.eq.s32.totalorder %v392, 3
      %vm1392 = vcmp.eq.s32.totalorder %v393, 3
      %vm1393 = vcmp.eq.s32.totalorder %v394, 3
      %vm1394 = vcmp.eq.s32.totalorder %v395, 3
      %vm1395 = vcmp.eq.s32.totalorder %v396, 3
      %vm1396 = vcmp.eq.s32.totalorder %v397, 3
      %vm1397 = vcmp.eq.s32.totalorder %v398, 3
      %vm1398 = vcmp.eq.s32.totalorder %v399, 3
      %vm1399 = vcmp.eq.s32.totalorder %v400, 3
      %vm1400 = vcmp.eq.s32.totalorder %v401, 3
      %vm1401 = vcmp.eq.s32.totalorder %v402, 3
      %vm1402 = vcmp.eq.s32.totalorder %v403, 3
      %vm1403 = vcmp.eq.s32.totalorder %v404, 3
      %vm1404 = vcmp.eq.s32.totalorder %v405, 3
      %vm1405 = vcmp.eq.s32.totalorder %v406, 3
      %vm1406 = vcmp.eq.s32.totalorder %v407, 3
      %vm1407 = vcmp.eq.s32.totalorder %v408, 3
      %vm1408 = vcmp.eq.s32.totalorder %v409, 3
      %vm1409 = vcmp.eq.s32.totalorder %v410, 3
      %vm1410 = vcmp.eq.s32.totalorder %v411, 3
      %vm1411 = vcmp.eq.s32.totalorder %v412, 3
      %vm1412 = vcmp.eq.s32.totalorder %v413, 3
      %vm1413 = vcmp.eq.s32.totalorder %v414, 3
      %vm1414 = vcmp.eq.s32.totalorder %v415, 3
      %vm1415 = vcmp.eq.s32.totalorder %v416, 3
      %vm1416 = vcmp.eq.s32.totalorder %v417, 3
      %vm1417 = vcmp.eq.s32.totalorder %v418, 3
      %vm1418 = vcmp.eq.s32.totalorder %v419, 3
      %vm1419 = vcmp.eq.s32.totalorder %v420, 3
      %vm1420 = vcmp.eq.s32.totalorder %v421, 3
      %vm1421 = vcmp.eq.s32.totalorder %v422, 3
      %v1422 = vsel %vm1390, 1, 0
      %v1423 = vsel %vm1391, 1, 0
      %v1424 = vsel %vm1392, 1, 0
      %v1425 = vsel %vm1393, 1, 0
      %v1426 = vsel %vm1394, 1, 0
      %v1427 = vsel %vm1395, 1, 0
      %v1428 = vsel %vm1396, 1, 0
      %v1429 = vsel %vm1397, 1, 0
      %v1430 = vsel %vm1398, 1, 0
      %v1431 = vsel %vm1399, 1, 0
      %v1432 = vsel %vm1400, 1, 0
      %v1433 = vsel %vm1401, 1, 0
      %v1434 = vsel %vm1402, 1, 0
      %v1435 = vsel %vm1403, 1, 0
      %v1436 = vsel %vm1404, 1, 0
      %v1437 = vsel %vm1405, 1, 0
      %v1438 = vsel %vm1406, 1, 0
      %v1439 = vsel %vm1407, 1, 0
      %v1440 = vsel %vm1408, 1, 0
      %v1441 = vsel %vm1409, 1, 0
      %v1442 = vsel %vm1410, 1, 0
      %v1443 = vsel %vm1411, 1, 0
      %v1444 = vsel %vm1412, 1, 0
      %v1445 = vsel %vm1413, 1, 0
      %v1446 = vsel %vm1414, 1, 0
      %v1447 = vsel %vm1415, 1, 0
      %v1448 = vsel %vm1416, 1, 0
      %v1449 = vsel %vm1417, 1, 0
      %v1450 = vsel %vm1418, 1, 0
      %v1451 = vsel %vm1419, 1, 0
      %v1452 = vsel %vm1420, 1, 0
      %v1453 = vsel %vm1421, 1, 0
      %v1454 = vcvt.s32.f32 %v1422
      %v1455 = vcvt.s32.f32 %v1423
      %v1456 = vcvt.s32.f32 %v1424
      %v1457 = vcvt.s32.f32 %v1425
      %v1458 = vcvt.s32.f32 %v1426
      %v1459 = vcvt.s32.f32 %v1427
      %v1460 = vcvt.s32.f32 %v1428
      %v1461 = vcvt.s32.f32 %v1429
      %v1462 = vcvt.s32.f32 %v1430
      %v1463 = vcvt.s32.f32 %v1431
      %v1464 = vcvt.s32.f32 %v1432
      %v1465 = vcvt.s32.f32 %v1433
      %v1466 = vcvt.s32.f32 %v1434
      %v1467 = vcvt.s32.f32 %v1435
      %v1468 = vcvt.s32.f32 %v1436
      %v1469 = vcvt.s32.f32 %v1437
      %v1470 = vcvt.s32.f32 %v1438
      %v1471 = vcvt.s32.f32 %v1439
      %v1472 = vcvt.s32.f32 %v1440
      %v1473 = vcvt.s32.f32 %v1441
      %v1474 = vcvt.s32.f32 %v1442
      %v1475 = vcvt.s32.f32 %v1443
      %v1476 = vcvt.s32.f32 %v1444
      %v1477 = vcvt.s32.f32 %v1445
      %v1478 = vcvt.s32.f32 %v1446
      %v1479 = vcvt.s32.f32 %v1447
      %v1480 = vcvt.s32.f32 %v1448
      %v1481 = vcvt.s32.f32 %v1449
      %v1482 = vcvt.s32.f32 %v1450
      %v1483 = vcvt.s32.f32 %v1451
      %v1484 = vcvt.s32.f32 %v1452
      %v1485 = vcvt.s32.f32 %v1453
      %1487 = vset.pattern.permute.xlu0 0
      %1488 = vperm.xlu0 %1487, %v1454
      %v1489 = vpop.permute.xlu0 %1488
      %1492 = vset.pattern.permute.xlu0 0
      %1493 = vperm.xlu0 %1492, %v1455
      %v1494 = vpop.permute.xlu0 %1493
      %1497 = vset.pattern.permute.xlu0 0
      %1498 = vperm.xlu0 %1497, %v1456
      %v1499 = vpop.permute.xlu0 %1498
      %1502 = vset.pattern.permute.xlu0 0
      %1503 = vperm.xlu0 %1502, %v1457
      %v1504 = vpop.permute.xlu0 %1503
      %1507 = vset.pattern.permute.xlu0 0
      %1508 = vperm.xlu0 %1507, %v1458
      %v1509 = vpop.permute.xlu0 %1508
      %1512 = vset.pattern.permute.xlu0 0
      %1513 = vperm.xlu0 %1512, %v1459
      %v1514 = vpop.permute.xlu0 %1513
      %1517 = vset.pattern.permute.xlu0 0
      %1518 = vperm.xlu0 %1517, %v1460
      %v1519 = vpop.permute.xlu0 %1518
      %1522 = vset.pattern.permute.xlu0 0
      %1523 = vperm.xlu0 %1522, %v1461
      %v1524 = vpop.permute.xlu0 %1523
      %1527 = vset.pattern.permute.xlu0 0
      %1528 = vperm.xlu0 %1527, %v1462
      %v1529 = vpop.permute.xlu0 %1528
      %1532 = vset.pattern.permute.xlu0 0
      %1533 = vperm.xlu0 %1532, %v1463
      %v1534 = vpop.permute.xlu0 %1533
      %1537 = vset.pattern.permute.xlu0 0
      %1538 = vperm.xlu0 %1537, %v1464
      %v1539 = vpop.permute.xlu0 %1538
      %1542 = vset.pattern.permute.xlu0 0
      %1543 = vperm.xlu0 %1542, %v1465
      %v1544 = vpop.permute.xlu0 %1543
      %1547 = vset.pattern.permute.xlu0 0
      %1548 = vperm.xlu0 %1547, %v1466
      %v1549 = vpop.permute.xlu0 %1548
      %1552 = vset.pattern.permute.xlu0 0
      %1553 = vperm.xlu0 %1552, %v1467
      %v1554 = vpop.permute.xlu0 %1553
      %1557 = vset.pattern.permute.xlu0 0
      %1558 = vperm.xlu0 %1557, %v1468
      %v1559 = vpop.permute.xlu0 %1558
      %1562 = vset.pattern.permute.xlu0 0
      %1563 = vperm.xlu0 %1562, %v1469
      %v1564 = vpop.permute.xlu0 %1563
      %1567 = vset.pattern.permute.xlu0 0
      %1568 = vperm.xlu0 %1567, %v1470
      %v1569 = vpop.permute.xlu0 %1568
      %1572 = vset.pattern.permute.xlu0 0
      %1573 = vperm.xlu0 %1572, %v1471
      %v1574 = vpop.permute.xlu0 %1573
      %1577 = vset.pattern.permute.xlu0 0
      %1578 = vperm.xlu0 %1577, %v1472
      %v1579 = vpop.permute.xlu0 %1578
      %1582 = vset.pattern.permute.xlu0 0
      %1583 = vperm.xlu0 %1582, %v1473
      %v1584 = vpop.permute.xlu0 %1583
      %1587 = vset.pattern.permute.xlu0 0
      %1588 = vperm.xlu0 %1587, %v1474
      %v1589 = vpop.permute.xlu0 %1588
      %1592 = vset.pattern.permute.xlu0 0
      %1593 = vperm.xlu0 %1592, %v1475
      %v1594 = vpop.permute.xlu0 %1593
      %1597 = vset.pattern.permute.xlu0 0
      %1598 = vperm.xlu0 %1597, %v1476
      %v1599 = vpop.permute.xlu0 %1598
      %1602 = vset.pattern.permute.xlu0 0
      %1603 = vperm.xlu0 %1602, %v1477
      %v1604 = vpop.permute.xlu0 %1603
      %1607 = vset.pattern.permute.xlu0 0
      %1608 = vperm.xlu0 %1607, %v1478
      %v1609 = vpop.permute.xlu0 %1608
      %1612 = vset.pattern.permute.xlu0 0
      %1613 = vperm.xlu0 %1612, %v1479
      %v1614 = vpop.permute.xlu0 %1613
      %1617 = vset.pattern.permute.xlu0 0
      %1618 = vperm.xlu0 %1617, %v1480
      %v1619 = vpop.permute.xlu0 %1618
      %1622 = vset.pattern.permute.xlu0 0
      %1623 = vperm.xlu0 %1622, %v1481
      %v1624 = vpop.permute.xlu0 %1623
      %1627 = vset.pattern.permute.xlu0 0
      %1628 = vperm.xlu0 %1627, %v1482
      %v1629 = vpop.permute.xlu0 %1628
      %1632 = vset.pattern.permute.xlu0 0
      %1633 = vperm.xlu0 %1632, %v1483
      %v1634 = vpop.permute.xlu0 %1633
      %1637 = vset.pattern.permute.xlu0 0
      %1638 = vperm.xlu0 %1637, %v1484
      %v1639 = vpop.permute.xlu0 %1638
      %1642 = vset.pattern.permute.xlu0 0
      %1643 = vperm.xlu0 %1642, %v1485
      %v1644 = vpop.permute.xlu0 %1643
      %v1646 = vperm.slane %v426, 3
      %v1647 = vmul.f32 %v1489, %v1646
      %v1648 = vmul.f32 %v1494, %v1646
      %v1649 = vmul.f32 %v1499, %v1646
      %v1650 = vmul.f32 %v1504, %v1646
      %v1651 = vmul.f32 %v1509, %v1646
      %v1652 = vmul.f32 %v1514, %v1646
      %v1653 = vmul.f32 %v1519, %v1646
      %v1654 = vmul.f32 %v1524, %v1646
      %v1655 = vmul.f32 %v1529, %v1646
      %v1656 = vmul.f32 %v1534, %v1646
      %v1657 = vmul.f32 %v1539, %v1646
      %v1658 = vmul.f32 %v1544, %v1646
      %v1659 = vmul.f32 %v1549, %v1646
      %v1660 = vmul.f32 %v1554, %v1646
      %v1661 = vmul.f32 %v1559, %v1646
      %v1662 = vmul.f32 %v1564, %v1646
      %v1663 = vmul.f32 %v1569, %v1646
      %v1664 = vmul.f32 %v1574, %v1646
      %v1665 = vmul.f32 %v1579, %v1646
      %v1666 = vmul.f32 %v1584, %v1646
      %v1667 = vmul.f32 %v1589, %v1646
      %v1668 = vmul.f32 %v1594, %v1646
      %v1669 = vmul.f32 %v1599, %v1646
      %v1670 = vmul.f32 %v1604, %v1646
      %v1671 = vmul.f32 %v1609, %v1646
      %v1672 = vmul.f32 %v1614, %v1646
      %v1673 = vmul.f32 %v1619, %v1646
      %v1674 = vmul.f32 %v1624, %v1646
      %v1675 = vmul.f32 %v1629, %v1646
      %v1676 = vmul.f32 %v1634, %v1646
      %v1677 = vmul.f32 %v1639, %v1646
      %v1678 = vmul.f32 %v1644, %v1646
      %v1679 = vadd.f32 %v1358, %v1647
      %v1680 = vadd.f32 %v1359, %v1648
      %v1681 = vadd.f32 %v1360, %v1649
      %v1682 = vadd.f32 %v1361, %v1650
      %v1683 = vadd.f32 %v1362, %v1651
      %v1684 = vadd.f32 %v1363, %v1652
      %v1685 = vadd.f32 %v1364, %v1653
      %v1686 = vadd.f32 %v1365, %v1654
      %v1687 = vadd.f32 %v1366, %v1655
      %v1688 = vadd.f32 %v1367, %v1656
      %v1689 = vadd.f32 %v1368, %v1657
      %v1690 = vadd.f32 %v1369, %v1658
      %v1691 = vadd.f32 %v1370, %v1659
      %v1692 = vadd.f32 %v1371, %v1660
      %v1693 = vadd.f32 %v1372, %v1661
      %v1694 = vadd.f32 %v1373, %v1662
      %v1695 = vadd.f32 %v1374, %v1663
      %v1696 = vadd.f32 %v1375, %v1664
      %v1697 = vadd.f32 %v1376, %v1665
      %v1698 = vadd.f32 %v1377, %v1666
      %v1699 = vadd.f32 %v1378, %v1667
      %v1700 = vadd.f32 %v1379, %v1668
      %v1701 = vadd.f32 %v1380, %v1669
      %v1702 = vadd.f32 %v1381, %v1670
      %v1703 = vadd.f32 %v1382, %v1671
      %v1704 = vadd.f32 %v1383, %v1672
      %v1705 = vadd.f32 %v1384, %v1673
      %v1706 = vadd.f32 %v1385, %v1674
      %v1707 = vadd.f32 %v1386, %v1675
      %v1708 = vadd.f32 %v1387, %v1676
      %v1709 = vadd.f32 %v1388, %v1677
      %v1710 = vadd.f32 %v1389, %v1678
      %v1743 = vunpack.c.l.b16 %v359
      %v1744 = vunpack.c.l.b16 %v360
      %v1745 = vunpack.c.l.b16 %v361
      %v1746 = vunpack.c.l.b16 %v362
      %v1747 = vunpack.c.l.b16 %v363
      %v1748 = vunpack.c.l.b16 %v364
      %v1749 = vunpack.c.l.b16 %v365
      %v1750 = vunpack.c.l.b16 %v366
      %v1751 = vunpack.c.l.b16 %v367
      %v1752 = vunpack.c.l.b16 %v368
      %v1753 = vunpack.c.l.b16 %v369
      %v1754 = vunpack.c.l.b16 %v370
      %v1755 = vunpack.c.l.b16 %v371
      %v1756 = vunpack.c.l.b16 %v372
      %v1757 = vunpack.c.l.b16 %v373
      %v1758 = vunpack.c.l.b16 %v374
      %v1759 = vunpack.c.l.b16 %v375
      %v1760 = vunpack.c.l.b16 %v376
      %v1761 = vunpack.c.l.b16 %v377
      %v1762 = vunpack.c.l.b16 %v378
      %v1763 = vunpack.c.l.b16 %v379
      %v1764 = vunpack.c.l.b16 %v380
      %v1765 = vunpack.c.l.b16 %v381
      %v1766 = vunpack.c.l.b16 %v382
      %v1767 = vunpack.c.l.b16 %v383
      %v1768 = vunpack.c.l.b16 %v384
      %v1769 = vunpack.c.l.b16 %v385
      %v1770 = vunpack.c.l.b16 %v386
      %v1771 = vunpack.c.l.b16 %v387
      %v1772 = vunpack.c.l.b16 %v388
      %v1773 = vunpack.c.l.b16 %v389
      %v1774 = vunpack.c.l.b16 %v390
      %v1775 = vpack.c.b16 %v1744, %v1743
      %v1776 = vpack.c.b16 %v1746, %v1745
      %v1777 = vpack.c.b16 %v1748, %v1747
      %v1778 = vpack.c.b16 %v1750, %v1749
      %v1779 = vpack.c.b16 %v1752, %v1751
      %v1780 = vpack.c.b16 %v1754, %v1753
      %v1781 = vpack.c.b16 %v1756, %v1755
      %v1782 = vpack.c.b16 %v1758, %v1757
      %v1783 = vpack.c.b16 %v1760, %v1759
      %v1784 = vpack.c.b16 %v1762, %v1761
      %v1785 = vpack.c.b16 %v1764, %v1763
      %v1786 = vpack.c.b16 %v1766, %v1765
      %v1787 = vpack.c.b16 %v1768, %v1767
      %v1788 = vpack.c.b16 %v1770, %v1769
      %v1789 = vpack.c.b16 %v1772, %v1771
      %v1790 = vpack.c.b16 %v1774, %v1773
      %v1793 = vunpack.c.l.b16 %v423
      %v1794 = vunpack.c.l.b16 %v424
      %v1795 = vpack.c.b16 %v1794, %v1793
      %vm1797 = vcmask 130048
      %v1799 = vsel %vm1797, %v1775, 0
      %v1802 = vsel %vm1797, %v1776, 0
      %v1805 = vsel %vm1797, %v1777, 0
      %v1808 = vsel %vm1797, %v1778, 0
      %v1811 = vsel %vm1797, %v1779, 0
      %v1814 = vsel %vm1797, %v1780, 0
      %v1817 = vsel %vm1797, %v1781, 0
      %v1820 = vsel %vm1797, %v1782, 0
      %v1823 = vsel %vm1797, %v1783, 0
      %v1826 = vsel %vm1797, %v1784, 0
      %v1829 = vsel %vm1797, %v1785, 0
      %v1832 = vsel %vm1797, %v1786, 0
      %v1835 = vsel %vm1797, %v1787, 0
      %v1838 = vsel %vm1797, %v1788, 0
      %v1841 = vsel %vm1797, %v1789, 0
      %v1844 = vsel %vm1797, %v1790, 0
      %1846 = vmatpush.bf16.msra.mxu0 0
      %1847 = vmatpush.bf16.msra.mxu0 0
      %1848 = vmatpush.bf16.msra.mxu0 0
      %1849 = vmatpush.bf16.msra.mxu0 0
      %1850 = vmatpush.bf16.msra.mxu0 0
      %1851 = vmatpush.bf16.msra.mxu0 0
      %1852 = vmatpush.bf16.msra.mxu0 0
      %1853 = vmatpush.bf16.msra.mxu0 %v1795
      %1854 = vmatmul.bf16.gmra.mxu0 %v1799
      %v1855 = vpop.f32.mrf.mxu0
      %v1856 = vadd.f32 %v1679, %v1855
      %v1857 = vpop.f32.mrf.mxu0
      %v1858 = vadd.f32 %v1680, %v1857
      %1859 = vmatmul.bf16.gmra.mxu0 %v1802
      %v1860 = vpop.f32.mrf.mxu0
      %v1861 = vadd.f32 %v1681, %v1860
      %v1862 = vpop.f32.mrf.mxu0
      %v1863 = vadd.f32 %v1682, %v1862
      %1864 = vmatmul.bf16.gmra.mxu0 %v1805
      %v1865 = vpop.f32.mrf.mxu0
      %v1866 = vadd.f32 %v1683, %v1865
      %v1867 = vpop.f32.mrf.mxu0
      %v1868 = vadd.f32 %v1684, %v1867
      %1869 = vmatmul.bf16.gmra.mxu0 %v1808
      %v1870 = vpop.f32.mrf.mxu0
      %v1871 = vadd.f32 %v1685, %v1870
      %v1872 = vpop.f32.mrf.mxu0
      %v1873 = vadd.f32 %v1686, %v1872
      %1874 = vmatmul.bf16.gmra.mxu0 %v1811
      %v1875 = vpop.f32.mrf.mxu0
      %v1876 = vadd.f32 %v1687, %v1875
      %v1877 = vpop.f32.mrf.mxu0
      %v1878 = vadd.f32 %v1688, %v1877
      %1879 = vmatmul.bf16.gmra.mxu0 %v1814
      %v1880 = vpop.f32.mrf.mxu0
      %v1881 = vadd.f32 %v1689, %v1880
      %v1882 = vpop.f32.mrf.mxu0
      %v1883 = vadd.f32 %v1690, %v1882
      %1884 = vmatmul.bf16.gmra.mxu0 %v1817
      %v1885 = vpop.f32.mrf.mxu0
      %v1886 = vadd.f32 %v1691, %v1885
      %v1887 = vpop.f32.mrf.mxu0
      %v1888 = vadd.f32 %v1692, %v1887
      %1889 = vmatmul.bf16.gmra.mxu0 %v1820
      %v1890 = vpop.f32.mrf.mxu0
      %v1891 = vadd.f32 %v1693, %v1890
      %v1892 = vpop.f32.mrf.mxu0
      %v1893 = vadd.f32 %v1694, %v1892
      %1894 = vmatmul.bf16.gmra.mxu0 %v1823
      %v1895 = vpop.f32.mrf.mxu0
      %v1896 = vadd.f32 %v1695, %v1895
      %v1897 = vpop.f32.mrf.mxu0
      %v1898 = vadd.f32 %v1696, %v1897
      %1899 = vmatmul.bf16.gmra.mxu0 %v1826
      %v1900 = vpop.f32.mrf.mxu0
      %v1901 = vadd.f32 %v1697, %v1900
      %v1902 = vpop.f32.mrf.mxu0
      %v1903 = vadd.f32 %v1698, %v1902
      %1904 = vmatmul.bf16.gmra.mxu0 %v1829
      %v1905 = vpop.f32.mrf.mxu0
      %v1906 = vadd.f32 %v1699, %v1905
      %v1907 = vpop.f32.mrf.mxu0
      %v1908 = vadd.f32 %v1700, %v1907
      %1909 = vmatmul.bf16.gmra.mxu0 %v1832
      %v1910 = vpop.f32.mrf.mxu0
      %v1911 = vadd.f32 %v1701, %v1910
      %v1912 = vpop.f32.mrf.mxu0
      %v1913 = vadd.f32 %v1702, %v1912
      %1914 = vmatmul.bf16.gmra.mxu0 %v1835
      %v1915 = vpop.f32.mrf.mxu0
      %v1916 = vadd.f32 %v1703, %v1915
      %v1917 = vpop.f32.mrf.mxu0
      %v1918 = vadd.f32 %v1704, %v1917
      %1919 = vmatmul.bf16.gmra.mxu0 %v1838
      %v1920 = vpop.f32.mrf.mxu0
      %v1921 = vadd.f32 %v1705, %v1920
      %v1922 = vpop.f32.mrf.mxu0
      %v1923 = vadd.f32 %v1706, %v1922
      %1924 = vmatmul.bf16.gmra.mxu0 %v1841
      %v1925 = vpop.f32.mrf.mxu0
      %v1926 = vadd.f32 %v1707, %v1925
      %v1927 = vpop.f32.mrf.mxu0
      %v1928 = vadd.f32 %v1708, %v1927
      %1929 = vmatmul.bf16.gmra.mxu0 %v1844
      %v1930 = vpop.f32.mrf.mxu0
      %v1931 = vadd.f32 %v1709, %v1930
      %v1932 = vpop.f32.mrf.mxu0
      %v1933 = vadd.f32 %v1710, %v1932
      %1934 = vdwg.mxu0
      %v1935 = vld [vmem:[%s4] sm:$0x1]
      %v1937 = vperm.slane %v1935, 0
      %v1939 = vadd.f32 %v1856, %v1937
      %v1940 = vadd.f32 %v1858, %v1937
      %v1941 = vadd.f32 %v1861, %v1937
      %v1942 = vadd.f32 %v1863, %v1937
      %v1943 = vadd.f32 %v1866, %v1937
      %v1944 = vadd.f32 %v1868, %v1937
      %v1945 = vadd.f32 %v1871, %v1937
      %v1946 = vadd.f32 %v1873, %v1937
      %v1947 = vadd.f32 %v1876, %v1937
      %v1948 = vadd.f32 %v1878, %v1937
      %v1949 = vadd.f32 %v1881, %v1937
      %v1950 = vadd.f32 %v1883, %v1937
      %v1951 = vadd.f32 %v1886, %v1937
      %v1952 = vadd.f32 %v1888, %v1937
      %v1953 = vadd.f32 %v1891, %v1937
      %v1954 = vadd.f32 %v1893, %v1937
      %v1955 = vadd.f32 %v1896, %v1937
      %v1956 = vadd.f32 %v1898, %v1937
      %v1957 = vadd.f32 %v1901, %v1937
      %v1958 = vadd.f32 %v1903, %v1937
      %v1959 = vadd.f32 %v1906, %v1937
      %v1960 = vadd.f32 %v1908, %v1937
      %v1961 = vadd.f32 %v1911, %v1937
      %v1962 = vadd.f32 %v1913, %v1937
      %v1963 = vadd.f32 %v1916, %v1937
      %v1964 = vadd.f32 %v1918, %v1937
      %v1965 = vadd.f32 %v1921, %v1937
      %v1966 = vadd.f32 %v1923, %v1937
      %v1967 = vadd.f32 %v1926, %v1937
      %v1968 = vadd.f32 %v1928, %v1937
      %v1969 = vadd.f32 %v1931, %v1937
      %v1970 = vadd.f32 %v1933, %v1937
      %v1971 = vmax.f32 %v1939, 0.0
      %v1972 = vmax.f32 %v1940, 0.0
      %v1973 = vmax.f32 %v1941, 0.0
      %v1974 = vmax.f32 %v1942, 0.0
      %v1975 = vmax.f32 %v1943, 0.0
      %v1976 = vmax.f32 %v1944, 0.0
      %v1977 = vmax.f32 %v1945, 0.0
      %v1978 = vmax.f32 %v1946, 0.0
      %v1979 = vmax.f32 %v1947, 0.0
      %v1980 = vmax.f32 %v1948, 0.0
      %v1981 = vmax.f32 %v1949, 0.0
      %v1982 = vmax.f32 %v1950, 0.0
      %v1983 = vmax.f32 %v1951, 0.0
      %v1984 = vmax.f32 %v1952, 0.0
      %v1985 = vmax.f32 %v1953, 0.0
      %v1986 = vmax.f32 %v1954, 0.0
      %v1987 = vmax.f32 %v1955, 0.0
      %v1988 = vmax.f32 %v1956, 0.0
      %v1989 = vmax.f32 %v1957, 0.0
      %v1990 = vmax.f32 %v1958, 0.0
      %v1991 = vmax.f32 %v1959, 0.0
      %v1992 = vmax.f32 %v1960, 0.0
      %v1993 = vmax.f32 %v1961, 0.0
      %v1994 = vmax.f32 %v1962, 0.0
      %v1995 = vmax.f32 %v1963, 0.0
      %v1996 = vmax.f32 %v1964, 0.0
      %v1997 = vmax.f32 %v1965, 0.0
      %v1998 = vmax.f32 %v1966, 0.0
      %v1999 = vmax.f32 %v1967, 0.0
      %v2000 = vmax.f32 %v1968, 0.0
      %v2001 = vmax.f32 %v1969, 0.0
      %v2002 = vmax.f32 %v1970, 0.0
      %v2003 = vpack.c.bf16 %v1972, %v1971
      %v2004 = vpack.c.bf16 %v1974, %v1973
      %v2005 = vpack.c.bf16 %v1976, %v1975
      %v2006 = vpack.c.bf16 %v1978, %v1977
      %v2007 = vpack.c.bf16 %v1980, %v1979
      %v2008 = vpack.c.bf16 %v1982, %v1981
      %v2009 = vpack.c.bf16 %v1984, %v1983
      %v2010 = vpack.c.bf16 %v1986, %v1985
      %v2011 = vpack.c.bf16 %v1988, %v1987
      %v2012 = vpack.c.bf16 %v1990, %v1989
      %v2013 = vpack.c.bf16 %v1992, %v1991
      %v2014 = vpack.c.bf16 %v1994, %v1993
      %v2015 = vpack.c.bf16 %v1996, %v1995
      %v2016 = vpack.c.bf16 %v1998, %v1997
      %v2017 = vpack.c.bf16 %v2000, %v1999
      %v2018 = vpack.c.bf16 %v2002, %v2001
      %v2019 = vld [vmem:[%s5] sm:$0xf]
      %v2020 = vld [vmem:[%s5 + $0x4] sm:$0xf]
      %v2021 = vld [vmem:[%s5 + $0x8] sm:$0xf]
      %v2022 = vld [vmem:[%s5 + $0xc] sm:$0xf]
      %v2023 = vld [vmem:[%s5 + $0x10] sm:$0xf]
      %v2024 = vld [vmem:[%s5 + $0x14] sm:$0xf]
      %v2025 = vld [vmem:[%s5 + $0x18] sm:$0xf]
      %v2026 = vld [vmem:[%s5 + $0x1c] sm:$0xf]
      %v2027 = vld [vmem:[%s5 + $0x20] sm:$0xf]
      %v2028 = vld [vmem:[%s5 + $0x24] sm:$0xf]
      %v2029 = vld [vmem:[%s5 + $0x28] sm:$0xf]
      %v2030 = vld [vmem:[%s5 + $0x2c] sm:$0xf]
      %v2031 = vld [vmem:[%s5 + $0x30] sm:$0xf]
      %v2032 = vld [vmem:[%s5 + $0x34] sm:$0xf]
      %v2033 = vld [vmem:[%s5 + $0x38] sm:$0xf]
      %v2034 = vld [vmem:[%s5 + $0x3c] sm:$0xf]
      %v2035 = vld [vmem:[%s6] sm:$0x1]
      %v2037 = vperm.slane %v2035, 0
      %v2055 = vunpack.c.l.b16 %v2019
      %v2056 = vunpack.c.l.b16 %v2020
      %v2057 = vunpack.c.l.b16 %v2021
      %v2058 = vunpack.c.l.b16 %v2022
      %v2059 = vunpack.c.l.b16 %v2023
      %v2060 = vunpack.c.l.b16 %v2024
      %v2061 = vunpack.c.l.b16 %v2025
      %v2062 = vunpack.c.l.b16 %v2026
      %v2063 = vunpack.c.l.b16 %v2027
      %v2064 = vunpack.c.l.b16 %v2028
      %v2065 = vunpack.c.l.b16 %v2029
      %v2066 = vunpack.c.l.b16 %v2030
      %v2067 = vunpack.c.l.b16 %v2031
      %v2068 = vunpack.c.l.b16 %v2032
      %v2069 = vunpack.c.l.b16 %v2033
      %v2070 = vunpack.c.l.b16 %v2034
      %v2071 = vpack.c.b16 %v2056, %v2055
      %v2072 = vpack.c.b16 %v2058, %v2057
      %v2073 = vpack.c.b16 %v2060, %v2059
      %v2074 = vpack.c.b16 %v2062, %v2061
      %v2075 = vpack.c.b16 %v2064, %v2063
      %v2076 = vpack.c.b16 %v2066, %v2065
      %v2077 = vpack.c.b16 %v2068, %v2067
      %v2078 = vpack.c.b16 %v2070, %v2069
      %2087 = vmatpush.bf16.msra.mxu0 %v2078
      %2088 = vmatpush.bf16.msra.mxu0 %v2077
      %2089 = vmatpush.bf16.msra.mxu0 %v2076
      %2090 = vmatpush.bf16.msra.mxu0 %v2075
      %2091 = vmatpush.bf16.msra.mxu0 %v2074
      %2092 = vmatpush.bf16.msra.mxu0 %v2073
      %2093 = vmatpush.bf16.msra.mxu0 %v2072
      %2094 = vmatpush.bf16.msra.mxu0 %v2071
      %2095 = vmatmul.bf16.gmra.mxu0 %v2003
      %v2096 = vpop.f32.mrf.mxu0
      %v2097 = vadd.f32 %v2037, %v2096
      %v2098 = vpop.f32.mrf.mxu0
      %v2099 = vadd.f32 %v2037, %v2098
      %2100 = vmatmul.bf16.gmra.mxu0 %v2004
      %v2101 = vpop.f32.mrf.mxu0
      %v2102 = vadd.f32 %v2037, %v2101
      %v2103 = vpop.f32.mrf.mxu0
      %v2104 = vadd.f32 %v2037, %v2103
      %2105 = vmatmul.bf16.gmra.mxu0 %v2005
      %v2106 = vpop.f32.mrf.mxu0
      %v2107 = vadd.f32 %v2037, %v2106
      %v2108 = vpop.f32.mrf.mxu0
      %v2109 = vadd.f32 %v2037, %v2108
      %2110 = vmatmul.bf16.gmra.mxu0 %v2006
      %v2111 = vpop.f32.mrf.mxu0
      %v2112 = vadd.f32 %v2037, %v2111
      %v2113 = vpop.f32.mrf.mxu0
      %v2114 = vadd.f32 %v2037, %v2113
      %2115 = vmatmul.bf16.gmra.mxu0 %v2007
      %v2116 = vpop.f32.mrf.mxu0
      %v2117 = vadd.f32 %v2037, %v2116
      %v2118 = vpop.f32.mrf.mxu0
      %v2119 = vadd.f32 %v2037, %v2118
      %2120 = vmatmul.bf16.gmra.mxu0 %v2008
      %v2121 = vpop.f32.mrf.mxu0
      %v2122 = vadd.f32 %v2037, %v2121
      %v2123 = vpop.f32.mrf.mxu0
      %v2124 = vadd.f32 %v2037, %v2123
      %2125 = vmatmul.bf16.gmra.mxu0 %v2009
      %v2126 = vpop.f32.mrf.mxu0
      %v2127 = vadd.f32 %v2037, %v2126
      %v2128 = vpop.f32.mrf.mxu0
      %v2129 = vadd.f32 %v2037, %v2128
      %2130 = vmatmul.bf16.gmra.mxu0 %v2010
      %v2131 = vpop.f32.mrf.mxu0
      %v2132 = vadd.f32 %v2037, %v2131
      %v2133 = vpop.f32.mrf.mxu0
      %v2134 = vadd.f32 %v2037, %v2133
      %2135 = vmatmul.bf16.gmra.mxu0 %v2011
      %v2136 = vpop.f32.mrf.mxu0
      %v2137 = vadd.f32 %v2037, %v2136
      %v2138 = vpop.f32.mrf.mxu0
      %v2139 = vadd.f32 %v2037, %v2138
      %2140 = vmatmul.bf16.gmra.mxu0 %v2012
      %v2141 = vpop.f32.mrf.mxu0
      %v2142 = vadd.f32 %v2037, %v2141
      %v2143 = vpop.f32.mrf.mxu0
      %v2144 = vadd.f32 %v2037, %v2143
      %2145 = vmatmul.bf16.gmra.mxu0 %v2013
      %v2146 = vpop.f32.mrf.mxu0
      %v2147 = vadd.f32 %v2037, %v2146
      %v2148 = vpop.f32.mrf.mxu0
      %v2149 = vadd.f32 %v2037, %v2148
      %2150 = vmatmul.bf16.gmra.mxu0 %v2014
      %v2151 = vpop.f32.mrf.mxu0
      %v2152 = vadd.f32 %v2037, %v2151
      %v2153 = vpop.f32.mrf.mxu0
      %v2154 = vadd.f32 %v2037, %v2153
      %2155 = vmatmul.bf16.gmra.mxu0 %v2015
      %v2156 = vpop.f32.mrf.mxu0
      %v2157 = vadd.f32 %v2037, %v2156
      %v2158 = vpop.f32.mrf.mxu0
      %v2159 = vadd.f32 %v2037, %v2158
      %2160 = vmatmul.bf16.gmra.mxu0 %v2016
      %v2161 = vpop.f32.mrf.mxu0
      %v2162 = vadd.f32 %v2037, %v2161
      %v2163 = vpop.f32.mrf.mxu0
      %v2164 = vadd.f32 %v2037, %v2163
      %2165 = vmatmul.bf16.gmra.mxu0 %v2017
      %v2166 = vpop.f32.mrf.mxu0
      %v2167 = vadd.f32 %v2037, %v2166
      %v2168 = vpop.f32.mrf.mxu0
      %v2169 = vadd.f32 %v2037, %v2168
      %2170 = vmatmul.bf16.gmra.mxu0 %v2018
      %v2171 = vpop.f32.mrf.mxu0
      %v2172 = vadd.f32 %v2037, %v2171
      %v2173 = vpop.f32.mrf.mxu0
      %v2174 = vadd.f32 %v2037, %v2173
      %2175 = vdwg.mxu0
      %v2176 = vmax.f32 %v2097, 0.0
      %v2177 = vmax.f32 %v2099, 0.0
      %v2178 = vmax.f32 %v2102, 0.0
      %v2179 = vmax.f32 %v2104, 0.0
      %v2180 = vmax.f32 %v2107, 0.0
      %v2181 = vmax.f32 %v2109, 0.0
      %v2182 = vmax.f32 %v2112, 0.0
      %v2183 = vmax.f32 %v2114, 0.0
      %v2184 = vmax.f32 %v2117, 0.0
      %v2185 = vmax.f32 %v2119, 0.0
      %v2186 = vmax.f32 %v2122, 0.0
      %v2187 = vmax.f32 %v2124, 0.0
      %v2188 = vmax.f32 %v2127, 0.0
      %v2189 = vmax.f32 %v2129, 0.0
      %v2190 = vmax.f32 %v2132, 0.0
      %v2191 = vmax.f32 %v2134, 0.0
      %v2192 = vmax.f32 %v2137, 0.0
      %v2193 = vmax.f32 %v2139, 0.0
      %v2194 = vmax.f32 %v2142, 0.0
      %v2195 = vmax.f32 %v2144, 0.0
      %v2196 = vmax.f32 %v2147, 0.0
      %v2197 = vmax.f32 %v2149, 0.0
      %v2198 = vmax.f32 %v2152, 0.0
      %v2199 = vmax.f32 %v2154, 0.0
      %v2200 = vmax.f32 %v2157, 0.0
      %v2201 = vmax.f32 %v2159, 0.0
      %v2202 = vmax.f32 %v2162, 0.0
      %v2203 = vmax.f32 %v2164, 0.0
      %v2204 = vmax.f32 %v2167, 0.0
      %v2205 = vmax.f32 %v2169, 0.0
      %v2206 = vmax.f32 %v2172, 0.0
      %v2207 = vmax.f32 %v2174, 0.0
      %v2208 = vpack.c.bf16 %v2177, %v2176
      %v2209 = vpack.c.bf16 %v2179, %v2178
      %v2210 = vpack.c.bf16 %v2181, %v2180
      %v2211 = vpack.c.bf16 %v2183, %v2182
      %v2212 = vpack.c.bf16 %v2185, %v2184
      %v2213 = vpack.c.bf16 %v2187, %v2186
      %v2214 = vpack.c.bf16 %v2189, %v2188
      %v2215 = vpack.c.bf16 %v2191, %v2190
      %v2216 = vpack.c.bf16 %v2193, %v2192
      %v2217 = vpack.c.bf16 %v2195, %v2194
      %v2218 = vpack.c.bf16 %v2197, %v2196
      %v2219 = vpack.c.bf16 %v2199, %v2198
      %v2220 = vpack.c.bf16 %v2201, %v2200
      %v2221 = vpack.c.bf16 %v2203, %v2202
      %v2222 = vpack.c.bf16 %v2205, %v2204
      %v2223 = vpack.c.bf16 %v2207, %v2206
      %v2224 = vld [vmem:[%s7] sm:$0xf]
      %v2225 = vld [vmem:[%s7 + $0x4] sm:$0xf]
      %v2226 = vld [vmem:[%s7 + $0x8] sm:$0xf]
      %v2227 = vld [vmem:[%s7 + $0xc] sm:$0xf]
      %v2228 = vld [vmem:[%s7 + $0x10] sm:$0xf]
      %v2229 = vld [vmem:[%s7 + $0x14] sm:$0xf]
      %v2230 = vld [vmem:[%s7 + $0x18] sm:$0xf]
      %v2231 = vld [vmem:[%s7 + $0x1c] sm:$0xf]
      %v2232 = vld [vmem:[%s7 + $0x20] sm:$0xf]
      %v2233 = vld [vmem:[%s7 + $0x24] sm:$0xf]
      %v2234 = vld [vmem:[%s7 + $0x28] sm:$0xf]
      %v2235 = vld [vmem:[%s7 + $0x2c] sm:$0xf]
      %v2236 = vld [vmem:[%s7 + $0x30] sm:$0xf]
      %v2237 = vld [vmem:[%s7 + $0x34] sm:$0xf]
      %v2238 = vld [vmem:[%s7 + $0x38] sm:$0xf]
      %v2239 = vld [vmem:[%s7 + $0x3c] sm:$0xf]
      %v2240 = vld [vmem:[%s8] sm:$0x1]
      %v2242 = vperm.slane %v2240, 0
      %v2260 = vunpack.c.l.b16 %v2224
      %v2261 = vunpack.c.l.b16 %v2225
      %v2262 = vunpack.c.l.b16 %v2226
      %v2263 = vunpack.c.l.b16 %v2227
      %v2264 = vunpack.c.l.b16 %v2228
      %v2265 = vunpack.c.l.b16 %v2229
      %v2266 = vunpack.c.l.b16 %v2230
      %v2267 = vunpack.c.l.b16 %v2231
      %v2268 = vunpack.c.l.b16 %v2232
      %v2269 = vunpack.c.l.b16 %v2233
      %v2270 = vunpack.c.l.b16 %v2234
      %v2271 = vunpack.c.l.b16 %v2235
      %v2272 = vunpack.c.l.b16 %v2236
      %v2273 = vunpack.c.l.b16 %v2237
      %v2274 = vunpack.c.l.b16 %v2238
      %v2275 = vunpack.c.l.b16 %v2239
      %v2276 = vpack.c.b16 %v2261, %v2260
      %v2277 = vpack.c.b16 %v2263, %v2262
      %v2278 = vpack.c.b16 %v2265, %v2264
      %v2279 = vpack.c.b16 %v2267, %v2266
      %v2280 = vpack.c.b16 %v2269, %v2268
      %v2281 = vpack.c.b16 %v2271, %v2270
      %v2282 = vpack.c.b16 %v2273, %v2272
      %v2283 = vpack.c.b16 %v2275, %v2274
      %2292 = vmatpush.bf16.msra.mxu0 %v2283
      %2293 = vmatpush.bf16.msra.mxu0 %v2282
      %2294 = vmatpush.bf16.msra.mxu0 %v2281
      %2295 = vmatpush.bf16.msra.mxu0 %v2280
      %2296 = vmatpush.bf16.msra.mxu0 %v2279
      %2297 = vmatpush.bf16.msra.mxu0 %v2278
      %2298 = vmatpush.bf16.msra.mxu0 %v2277
      %2299 = vmatpush.bf16.msra.mxu0 %v2276
      %2300 = vmatmul.bf16.gmra.mxu0 %v2208
      %v2301 = vpop.f32.mrf.mxu0
      %v2302 = vadd.f32 %v2242, %v2301
      %v2303 = vpop.f32.mrf.mxu0
      %v2304 = vadd.f32 %v2242, %v2303
      %2305 = vmatmul.bf16.gmra.mxu0 %v2209
      %v2306 = vpop.f32.mrf.mxu0
      %v2307 = vadd.f32 %v2242, %v2306
      %v2308 = vpop.f32.mrf.mxu0
      %v2309 = vadd.f32 %v2242, %v2308
      %2310 = vmatmul.bf16.gmra.mxu0 %v2210
      %v2311 = vpop.f32.mrf.mxu0
      %v2312 = vadd.f32 %v2242, %v2311
      %v2313 = vpop.f32.mrf.mxu0
      %v2314 = vadd.f32 %v2242, %v2313
      %2315 = vmatmul.bf16.gmra.mxu0 %v2211
      %v2316 = vpop.f32.mrf.mxu0
      %v2317 = vadd.f32 %v2242, %v2316
      %v2318 = vpop.f32.mrf.mxu0
      %v2319 = vadd.f32 %v2242, %v2318
      %2320 = vmatmul.bf16.gmra.mxu0 %v2212
      %v2321 = vpop.f32.mrf.mxu0
      %v2322 = vadd.f32 %v2242, %v2321
      %v2323 = vpop.f32.mrf.mxu0
      %v2324 = vadd.f32 %v2242, %v2323
      %2325 = vmatmul.bf16.gmra.mxu0 %v2213
      %v2326 = vpop.f32.mrf.mxu0
      %v2327 = vadd.f32 %v2242, %v2326
      %v2328 = vpop.f32.mrf.mxu0
      %v2329 = vadd.f32 %v2242, %v2328
      %2330 = vmatmul.bf16.gmra.mxu0 %v2214
      %v2331 = vpop.f32.mrf.mxu0
      %v2332 = vadd.f32 %v2242, %v2331
      %v2333 = vpop.f32.mrf.mxu0
      %v2334 = vadd.f32 %v2242, %v2333
      %2335 = vmatmul.bf16.gmra.mxu0 %v2215
      %v2336 = vpop.f32.mrf.mxu0
      %v2337 = vadd.f32 %v2242, %v2336
      %v2338 = vpop.f32.mrf.mxu0
      %v2339 = vadd.f32 %v2242, %v2338
      %2340 = vmatmul.bf16.gmra.mxu0 %v2216
      %v2341 = vpop.f32.mrf.mxu0
      %v2342 = vadd.f32 %v2242, %v2341
      %v2343 = vpop.f32.mrf.mxu0
      %v2344 = vadd.f32 %v2242, %v2343
      %2345 = vmatmul.bf16.gmra.mxu0 %v2217
      %v2346 = vpop.f32.mrf.mxu0
      %v2347 = vadd.f32 %v2242, %v2346
      %v2348 = vpop.f32.mrf.mxu0
      %v2349 = vadd.f32 %v2242, %v2348
      %2350 = vmatmul.bf16.gmra.mxu0 %v2218
      %v2351 = vpop.f32.mrf.mxu0
      %v2352 = vadd.f32 %v2242, %v2351
      %v2353 = vpop.f32.mrf.mxu0
      %v2354 = vadd.f32 %v2242, %v2353
      %2355 = vmatmul.bf16.gmra.mxu0 %v2219
      %v2356 = vpop.f32.mrf.mxu0
      %v2357 = vadd.f32 %v2242, %v2356
      %v2358 = vpop.f32.mrf.mxu0
      %v2359 = vadd.f32 %v2242, %v2358
      %2360 = vmatmul.bf16.gmra.mxu0 %v2220
      %v2361 = vpop.f32.mrf.mxu0
      %v2362 = vadd.f32 %v2242, %v2361
      %v2363 = vpop.f32.mrf.mxu0
      %v2364 = vadd.f32 %v2242, %v2363
      %2365 = vmatmul.bf16.gmra.mxu0 %v2221
      %v2366 = vpop.f32.mrf.mxu0
      %v2367 = vadd.f32 %v2242, %v2366
      %v2368 = vpop.f32.mrf.mxu0
      %v2369 = vadd.f32 %v2242, %v2368
      %2370 = vmatmul.bf16.gmra.mxu0 %v2222
      %v2371 = vpop.f32.mrf.mxu0
      %v2372 = vadd.f32 %v2242, %v2371
      %v2373 = vpop.f32.mrf.mxu0
      %v2374 = vadd.f32 %v2242, %v2373
      %2375 = vmatmul.bf16.gmra.mxu0 %v2223
      %v2376 = vpop.f32.mrf.mxu0
      %v2377 = vadd.f32 %v2242, %v2376
      %v2378 = vpop.f32.mrf.mxu0
      %v2379 = vadd.f32 %v2242, %v2378
      %2380 = vdwg.mxu0
      %2381 = vst [vmem:[%s356] sm:$0xff] %v2302
      %2382 = vst [vmem:[%s356 + $0x8] sm:$0xff] %v2304
      %2383 = vst [vmem:[%s356 + $0x10] sm:$0xff] %v2307
      %2384 = vst [vmem:[%s356 + $0x18] sm:$0xff] %v2309
      %2385 = vst [vmem:[%s356 + $0x20] sm:$0xff] %v2312
      %2386 = vst [vmem:[%s356 + $0x28] sm:$0xff] %v2314
      %2387 = vst [vmem:[%s356 + $0x30] sm:$0xff] %v2317
      %2388 = vst [vmem:[%s356 + $0x38] sm:$0xff] %v2319
      %2389 = vst [vmem:[%s356 + $0x40] sm:$0xff] %v2322
      %2390 = vst [vmem:[%s356 + $0x48] sm:$0xff] %v2324
      %2391 = vst [vmem:[%s356 + $0x50] sm:$0xff] %v2327
      %2392 = vst [vmem:[%s356 + $0x58] sm:$0xff] %v2329
      %2393 = vst [vmem:[%s356 + $0x60] sm:$0xff] %v2332
      %2394 = vst [vmem:[%s356 + $0x68] sm:$0xff] %v2334
      %2395 = vst [vmem:[%s356 + $0x70] sm:$0xff] %v2337
      %2396 = vst [vmem:[%s356 + $0x78] sm:$0xff] %v2339
      %2397 = vst [vmem:[%s356 + $0x80] sm:$0xff] %v2342
      %2398 = vst [vmem:[%s356 + $0x88] sm:$0xff] %v2344
      %2399 = vst [vmem:[%s356 + $0x90] sm:$0xff] %v2347
      %2400 = vst [vmem:[%s356 + $0x98] sm:$0xff] %v2349
      %2401 = vst [vmem:[%s356 + $0xa0] sm:$0xff] %v2352
      %2402 = vst [vmem:[%s356 + $0xa8] sm:$0xff] %v2354
      %2403 = vst [vmem:[%s356 + $0xb0] sm:$0xff] %v2357
      %2404 = vst [vmem:[%s356 + $0xb8] sm:$0xff] %v2359
      %2405 = vst [vmem:[%s356 + $0xc0] sm:$0xff] %v2362
      %2406 = vst [vmem:[%s356 + $0xc8] sm:$0xff] %v2364
      %2407 = vst [vmem:[%s356 + $0xd0] sm:$0xff] %v2367
      %2408 = vst [vmem:[%s356 + $0xd8] sm:$0xff] %v2369
      %2409 = vst [vmem:[%s356 + $0xe0] sm:$0xff] %v2372
      %2410 = vst [vmem:[%s356 + $0xe8] sm:$0xff] %v2374
      %2411 = vst [vmem:[%s356 + $0xf0] sm:$0xff] %v2377
      %2412 = vst [vmem:[%s356 + $0xf8] sm:$0xff] %v2379
      %s2413 = smul.u32 32, %s20
      %p2414 = scmp.lt.s32.totalorder %s2413, 63
      %s2415 = scalar_select %p2414, %s2413, 63
      %s2416 = smul.addr %s2415, 8
      %s2417 = scalar_lea.vmem %s9, %s2416
      // Predicated region
      $region57: #{transition_network.1} parent=55 // pred_check
        %p2418 = pneg %p237
      $region58: #{transition_network.1} parent=55 // pred_check_branch
        %2420 = sbr.rel (%p2418) target = $region60
      $region59: #{transition_network.1} parent=55 // pred_region
        %s2421 = smul.u32 32, %s20
      $region60: #{transition_network.1} parent=55 // pred_fallthru
        _
    $region56: #{transition_network.1} parent=5 // pred_fallthru
      _
    %p2422 = scmp.le.s32.totalorder 2, %s15
    // Predicated region
    $region61: #{transition_network.1} parent=5 // pred_check
      %p2423 = pneg %p2422
    $region62: #{transition_network.1} parent=5 // pred_check_branch
      %2425 = sbr.rel (%p2423) target = $region64
    $region63: #{transition_network.1} parent=5 // pred_region
      %s2426 = ssub.s32 %s15, 2
      // Predicated region
      $region65: #{transition_network.1} parent=63 // pred_check
        %p2427 = pneg %p243
      $region66: #{transition_network.1} parent=63 // pred_check_branch
        %2429 = sbr.rel (%p2427) target = $region68
      $region67: #{transition_network.1} parent=63 // pred_region
        %s2430 = smul.u32 32, %s21
        %p2431 = scmp.lt.s32.totalorder %s2430, 63
        %s2432 = scalar_select %p2431, %s2430, 63
        %s2433 = smul.addr %s2432, 8
        %s2434 = scalar_lea.vmem %s9, %s2433
      $region68: #{transition_network.1} parent=63 // pred_fallthru
        _
    $region64: #{transition_network.1} parent=5 // pred_fallthru
      _
  $region6: #{transition_network.1} parent=0 // loop_footer
    %s19 = sadd.s32 1, %s15
  $region7: #{transition_network.1} parent=0 // loop_footer_branch
    %14 = sbr.rel target = $region3
  $region8: #{transition_network.1} parent=0 // loop_exit
    _

</llo_original>
